<compile_context>
chip_gen: v5e
topology: v5e:2x2
jax: 0.10.0
libtpu: 0.0.40
codegen_flags: <defaults>
</compile_context>

<pallas_src>
import functools

import jax
import jax.numpy as jnp
import numpy as np
from jax.experimental import pallas as pl
from jax.experimental.pallas import tpu as pltpu


# ---------------------------------------------------------------------------
# In-kernel helpers
# ---------------------------------------------------------------------------
def _grid2point(grid_ref, idx_ref, coords, H, W, hw_chunk):
    """Bilinear grid_sample (align_corners=True, border clamp for in-range /
    clipped coords) as separable 'hat' weights times the flattened grid.

    grid_ref : (H*W, C2) bf16 VMEM ref (channels-last, row-major flat HW)
    idx_ref  : (2, H*W) f32  [row index; col index] of each flat position
    coords   : (TILE_N, 2) f32 normalized coords in [-1, 1] (x, y)
    Returns  : (TILE_N, C2) f32 sampled features.
    """
    wf, hf = float(W - 1), float(H - 1)
    ix = jnp.clip((coords[:, 0:1] + 1.0) * 0.5 * wf, 0.0, wf)        # (TN, 1)
    iy = jnp.clip((coords[:, 1:2] + 1.0) * 0.5 * hf, 0.0, hf)        # (TN, 1)

    hw = H * W
    acc = None
    # Static chunking over the flattened grid keeps the (TN, hw_chunk) sampling
    # tile bounded in VMEM regardless of grid size; f32 accumulation across chunks.
    for c0 in range(0, hw, hw_chunk):
        cs = min(hw_chunk, hw - c0)
        rid = idx_ref[0:1, c0:c0 + cs]                               # (1, cs)
        cid = idx_ref[1:2, c0:c0 + cs]                               # (1, cs)
        # hat weights == corner-sum bilinear weights (incl. border clamp)
        rw = jnp.maximum(1.0 - jnp.abs(rid - iy), 0.0)               # (TN, cs)
        cw = jnp.maximum(1.0 - jnp.abs(cid - ix), 0.0)               # (TN, cs)
        s = (rw * cw).astype(jnp.bfloat16)
        part = jnp.dot(s, grid_ref[c0:c0 + cs, :],
                       preferred_element_type=jnp.float32)
        acc = part if acc is None else acc + part
    return acc


def _mvfuse_kernel(Hb, Wb, Hr, Wr, C_out, hw_chunk,
                   pt_ref, bev_ref, rv_ref, cbev_ref, crv_ref,
                   idx_bev_ref, idx_rv_ref,
                   w_fuse_ref, w_heads_ref, bias_ref, out_ref):
    f32, bf16 = jnp.float32, jnp.bfloat16

    pt = pt_ref[...]                                                  # (TN, C_pt) bf16

    # grid2point for both views; each sampled result is [sem | ins] channels.
    p_bev = _grid2point(bev_ref, idx_bev_ref, cbev_ref[...], Hb, Wb, hw_chunk)
    p_rv = _grid2point(rv_ref, idx_rv_ref, crv_ref[...], Hr, Wr, hw_chunk)

    # Fused CatFusion (both branches) as a single K=160 MXU dot.
    x_cat = jnp.concatenate([pt, p_bev.astype(bf16), p_rv.astype(bf16)], axis=1)
    h_w = w_fuse_ref.shape[1]                                         # 2*C_out
    h = (jnp.dot(x_cat, w_fuse_ref[...], preferred_element_type=f32)
         + bias_ref[0:1, 0:h_w])
    h = jnp.maximum(h, 0.0)                                           # ReLU (BN folded in W)

    # Prediction heads only (h_sem is passed through in f32, not via bf16 matmul).
    head_w = w_heads_ref.shape[1]
    heads = (jnp.dot(h.astype(bf16), w_heads_ref[...], preferred_element_type=f32)
             + bias_ref[1:2, 0:head_w])

    # Single lane-dense (TN, 128) f32 store: [h_sem | sem | off | hmap_logit | pad].
    out_ref[...] = jnp.concatenate([h[:, 0:C_out], heads], axis=1)


# ---------------------------------------------------------------------------
# Parameter packing (glue): 14 per-layer tensors -> 3 kernel operands
# ---------------------------------------------------------------------------
def _pack_params(params, C_pt, C_bev, C_rv, C_out, n_cls):
    f32 = jnp.float32

    def z(r, c):
        return jnp.zeros((r, c), f32)

    # Fusion weight: row order [pt | bev_sem | bev_ins | rv_sem | rv_ins],
    # column order [h_sem | h_ins].
    w_fuse = jnp.concatenate([
        jnp.concatenate([params["w_pt_s"], params["w_pt_i"]], axis=1),
        jnp.concatenate([params["w_bev_s"], z(C_bev, C_out)], axis=1),
        jnp.concatenate([z(C_bev, C_out), params["w_bev_i"]], axis=1),
        jnp.concatenate([params["w_rv_s"], z(C_rv, C_out)], axis=1),
        jnp.concatenate([z(C_rv, C_out), params["w_rv_i"]], axis=1),
    ], axis=0)                                           # (C_pt+2C_bev+2C_rv, 2*C_out)
    b_fuse = jnp.concatenate([params["b_fuse_s"], params["b_fuse_i"]], axis=1)

    # Head weight: columns [pred_sem | pred_off | pred_hmap | pad];
    # rows [h_sem block ; h_ins block].  Width chosen so C_out + HEAD_W = OUT_W (x128).
    core = C_out + n_cls + 3 + 1
    OUT_W = ((core + 127) // 128) * 128
    HEAD_W = OUT_W - C_out
    pad = HEAD_W - (n_cls + 4)
    w_heads = jnp.concatenate([
        jnp.concatenate([params["w_sem"], z(C_out, 3), z(C_out, 1), z(C_out, pad)], axis=1),
        jnp.concatenate([z(C_out, n_cls), params["w_off"], params["w_hm"], z(C_out, pad)], axis=1),
    ], axis=0)                                           # (2*C_out, HEAD_W)
    b_heads = jnp.concatenate([params["b_sem"], params["b_off"], params["b_hm"],
                               z(1, pad)], axis=1)       # (1, HEAD_W)

    H_W = 2 * C_out
    BW = max(H_W, HEAD_W)
    biases = jnp.concatenate([
        jnp.pad(b_fuse, ((0, 0), (0, BW - H_W))),
        jnp.pad(b_heads, ((0, 0), (0, BW - HEAD_W))),
    ], axis=0)                                           # (2, BW) f32

    return (w_fuse.astype(jnp.bfloat16), w_heads.astype(jnp.bfloat16),
            biases, OUT_W)


# ---------------------------------------------------------------------------
# Wrapper (glue: layout conversion + pallas_call)
# ---------------------------------------------------------------------------
def mvfuse_pallas(params, point_feat_tmp, bev_feat_sem, bev_feat_ins, pc_coord_bev,
                  rv_feat_sem, rv_feat_ins, pc_coord_rv, *, tile_n=None, hw_chunk=2048):
    B, C_pt, N, _ = point_feat_tmp.shape
    _, C_bev, Hb, Wb = bev_feat_sem.shape
    _, C_rv, Hr, Wr = rv_feat_sem.shape
    C_out = params["w_pt_s"].shape[1]
    n_cls = params["w_sem"].shape[1]

    # TODO(synk): at production grid sizes these NCHW -> points-major transposes
    # cost more HBM traffic than the kernel; accept channels-last upstream.
    def grid_cl(x):                      # (B, C, H, W) -> (B, H*W, C)
        Bb, C, H, W = x.shape
        return jnp.transpose(x.reshape(Bb, C, H * W), (0, 2, 1))

    pt = jnp.transpose(point_feat_tmp[..., 0], (0, 2, 1)).astype(jnp.bfloat16)   # (B,N,C_pt)
    bev_cat = jnp.concatenate([grid_cl(bev_feat_sem), grid_cl(bev_feat_ins)],
                              axis=-1).astype(jnp.bfloat16)   # (B, Hb*Wb, 2*C_bev)
    rv_cat = jnp.concatenate([grid_cl(rv_feat_sem), grid_cl(rv_feat_ins)],
                             axis=-1).astype(jnp.bfloat16)    # (B, Hr*Wr, 2*C_rv)
    cbev = pc_coord_bev[:, :, 0, :]                           # (B, N, 2) f32
    crv = pc_coord_rv[:, :, 0, :]

    # N tiling (points axis is the inner grid axis; batch outermost).
    if tile_n is None:
        tile_n = min(512, -(-N // 8) * 8)
    n_pad = -(-N // tile_n) * tile_n
    if n_pad != N:
        p = n_pad - N
        pt = jnp.pad(pt, ((0, 0), (0, p), (0, 0)))
        cbev = jnp.pad(cbev, ((0, 0), (0, p), (0, 0)))        # pad coords -> center sample
        crv = jnp.pad(crv, ((0, 0), (0, p), (0, 0)))

    # Host-precomputed flat -> (row, col) index tables (avoids iota / int-divide
    # passes over the big tile inside the kernel).
    def make_idx(H, W):
        ii = np.arange(H * W)
        return jnp.asarray(np.stack([ii // W, ii % W]).astype(np.float32))  # (2, H*W)
    idx_bev = make_idx(Hb, Wb)
    idx_rv = make_idx(Hr, Wr)

    w_fuse, w_heads, biases, OUT_W = _pack_params(params, C_pt, C_bev, C_rv, C_out, n_cls)

    grid = (B, n_pad // tile_n)   # N innermost: grid features stay resident per batch

    in_specs = [
        pl.BlockSpec((None, tile_n, C_pt), lambda b, n: (b, n, 0)),          # pt
        pl.BlockSpec((None, Hb * Wb, 2 * C_bev), lambda b, n: (b, 0, 0)),    # bev_cat
        pl.BlockSpec((None, Hr * Wr, 2 * C_rv), lambda b, n: (b, 0, 0)),     # rv_cat
        pl.BlockSpec((None, tile_n, 2), lambda b, n: (b, n, 0)),             # cbev
        pl.BlockSpec((None, tile_n, 2), lambda b, n: (b, n, 0)),             # crv
        pl.BlockSpec(idx_bev.shape, lambda b, n: (0, 0)),                    # idx_bev
        pl.BlockSpec(idx_rv.shape, lambda b, n: (0, 0)),                     # idx_rv
        pl.BlockSpec(w_fuse.shape, lambda b, n: (0, 0)),                     # w_fuse
        pl.BlockSpec(w_heads.shape, lambda b, n: (0, 0)),                    # w_heads
        pl.BlockSpec(biases.shape, lambda b, n: (0, 0)),                     # biases
    ]
    out_shape = jax.ShapeDtypeStruct((B, n_pad, OUT_W), jnp.float32)
    out_specs = pl.BlockSpec((None, tile_n, OUT_W), lambda b, n: (b, n, 0))

    kernel = functools.partial(_mvfuse_kernel, Hb, Wb, Hr, Wr, C_out, hw_chunk)

    packed = pl.pallas_call(
        kernel,
        out_shape=out_shape,
        grid_spec=pltpu.PrefetchScalarGridSpec(
            num_scalar_prefetch=0,
            grid=grid,
            in_specs=in_specs,
            out_specs=out_specs,
        ),
        compiler_params=pltpu.CompilerParams(
            dimension_semantics=("parallel", "parallel"),
            vmem_limit_bytes=64 * 1024 * 1024),   # explicit; <= physical on v5e/v6e/v7x
    )(pt, bev_cat, rv_cat, cbev, crv, idx_bev, idx_rv, w_fuse, w_heads, biases)

    # glue: unpack the lane-dense result back to PyTorch output layouts.
    packed = packed[:, :N, :]
    point_feat_sem = jnp.transpose(packed[:, :, 0:C_out], (0, 2, 1))[..., None]
    pred_sem = jnp.transpose(packed[:, :, C_out:C_out + n_cls], (0, 2, 1))[..., None]
    pred_offset = packed[:, :, C_out + n_cls:C_out + n_cls + 3]
    pred_hmap = jax.nn.sigmoid(packed[:, :, C_out + n_cls + 3:C_out + n_cls + 4])
    return point_feat_sem, pred_sem, pred_offset, pred_hmap


# ---------------------------------------------------------------------------
# Deterministic parameter initialization (synthetic; shapes from __init__)
# ---------------------------------------------------------------------------
def init_params(key, c_pt, c_bev, c_rv, c_out, n_cls, eps=1e-5):
    keys = jax.random.split(key, 20)

    def fusion_branch(kofs):
        c_cat = c_pt + c_bev + c_rv
        w = 0.1 * jax.random.normal(keys[kofs + 0], (c_cat, c_out), jnp.float32)
        gamma = 1.0 + 0.1 * jax.random.normal(keys[kofs + 1], (c_out,), jnp.float32)
        beta = 0.1 * jax.random.normal(keys[kofs + 2], (c_out,), jnp.float32)
        mean = 0.1 * jax.random.normal(keys[kofs + 3], (c_out,), jnp.float32)
        var = jnp.abs(1.0 + 0.1 * jax.random.normal(keys[kofs + 4], (c_out,), jnp.float32))
        scale = gamma / jnp.sqrt(var + eps)          # fold eval-mode BatchNorm2d
        w_fold = w * scale[None, :]
        b_fold = (beta - mean * scale)[None, :]
        return (w_fold[:c_pt], w_fold[c_pt:c_pt + c_bev], w_fold[c_pt + c_bev:], b_fold)

    w_pt_s, w_bev_s, w_rv_s, b_fuse_s = fusion_branch(0)
    w_pt_i, w_bev_i, w_rv_i, b_fuse_i = fusion_branch(5)

    def pred_head(kofs, cout):
        w = 0.1 * jax.random.normal(keys[kofs], (c_out, cout), jnp.float32)
        b = 0.1 * jax.random.normal(keys[kofs + 1], (1, cout), jnp.float32)
        return w, b

    w_sem, b_sem = pred_head(10, n_cls)   # pred_layer_sem
    w_off, b_off = pred_head(12, 3)       # pred_layer_offset
    w_hm, b_hm = pred_head(14, 1)         # pred_layer_hmap (sigmoid applied in wrapper)

    return dict(w_pt_s=w_pt_s, w_bev_s=w_bev_s, w_rv_s=w_rv_s, b_fuse_s=b_fuse_s,
                w_sem=w_sem, b_sem=b_sem,
                w_pt_i=w_pt_i, w_bev_i=w_bev_i, w_rv_i=w_rv_i, b_fuse_i=b_fuse_i,
                w_off=w_off, b_off=b_off, w_hm=w_hm, b_hm=b_hm)


# ---------------------------------------------------------------------------
# Pure-JAX f32 reference (gather-based bilinear sampling) for verification
# ---------------------------------------------------------------------------
def _bilinear_sample_ref(grid_flat, coords, H, W):
    x = coords[:, 0]
    y = coords[:, 1]
    ix = jnp.clip((x + 1.0) * 0.5 * (W - 1), 0.0, float(W - 1))
    iy = jnp.clip((y + 1.0) * 0.5 * (H - 1), 0.0, float(H - 1))
    x0 = jnp.floor(ix).astype(jnp.int32)
    y0 = jnp.floor(iy).astype(jnp.int32)
    x1 = jnp.minimum(x0 + 1, W - 1)
    y1 = jnp.minimum(y0 + 1, H - 1)
    wx = ix - x0.astype(jnp.float32)
    wy = iy - y0.astype(jnp.float32)

    def g(yi, xi):
        return grid_flat[yi * W + xi]   # (N, C)

    return (g(y0, x0) * ((1 - wy) * (1 - wx))[:, None]
            + g(y0, x1) * ((1 - wy) * wx)[:, None]
            + g(y1, x0) * (wy * (1 - wx))[:, None]
            + g(y1, x1) * (wy * wx)[:, None])


def mvfuse_reference(params, point_feat_tmp, bev_feat_sem, bev_feat_ins, pc_coord_bev,
                     rv_feat_sem, rv_feat_ins, pc_coord_rv):
    B, C_pt, N, _ = point_feat_tmp.shape
    _, _, Hb, Wb = bev_feat_sem.shape
    _, _, Hr, Wr = rv_feat_sem.shape

    def grid_cl(x):
        Bb, C, H, W = x.shape
        return jnp.transpose(x.reshape(Bb, C, H * W), (0, 2, 1))

    pt = jnp.transpose(point_feat_tmp[..., 0], (0, 2, 1))
    bev_s, bev_i = grid_cl(bev_feat_sem), grid_cl(bev_feat_ins)
    rv_s, rv_i = grid_cl(rv_feat_sem), grid_cl(rv_feat_ins)

    feats, sems, offs, hms = [], [], [], []
    for b in range(B):
        cb = pc_coord_bev[b, :, 0, :]
        cr = pc_coord_rv[b, :, 0, :]
        p_bev_sem = _bilinear_sample_ref(bev_s[b], cb, Hb, Wb)
        p_rv_sem = _bilinear_sample_ref(rv_s[b], cr, Hr, Wr)
        p_bev_ins = _bilinear_sample_ref(bev_i[b], cb, Hb, Wb)
        p_rv_ins = _bilinear_sample_ref(rv_i[b], cr, Hr, Wr)

        h_sem = jnp.maximum(pt[b] @ params["w_pt_s"] + p_bev_sem @ params["w_bev_s"]
                            + p_rv_sem @ params["w_rv_s"] + params["b_fuse_s"], 0.0)
        pred_sem = h_sem @ params["w_sem"] + params["b_sem"]
        h_ins = jnp.maximum(pt[b] @ params["w_pt_i"] + p_bev_ins @ params["w_bev_i"]
                            + p_rv_ins @ params["w_rv_i"] + params["b_fuse_i"], 0.0)
        pred_off = h_ins @ params["w_off"] + params["b_off"]
        pred_hm = jax.nn.sigmoid(h_ins @ params["w_hm"] + params["b_hm"])
        feats.append(h_sem)
        sems.append(pred_sem)
        offs.append(pred_off)
        hms.append(pred_hm)

    feat = jnp.transpose(jnp.stack(feats), (0, 2, 1))[..., None]
    sem = jnp.transpose(jnp.stack(sems), (0, 2, 1))[..., None]
    return feat, sem, jnp.stack(offs), jnp.stack(hms)


# ---------------------------------------------------------------------------
if __name__ == "__main__":
    key = jax.random.PRNGKey(0)
    B, N = 2, 128
    C_pt, C_bev, C_rv = 32, 32, 32      # bev_context_layer[0], bev_channels, rv_channels
    C_out, n_cls = 64, 8                # point_feat_out_channels, class_num
    Hb, Wb = 16, 16                     # BEV grid
    Hr, Wr = 8, 32                      # range-view grid

    k = jax.random.split(key, 8)
    point_feat_tmp = jax.random.normal(k[0], (B, C_pt, N, 1), jnp.float32)
    bev_feat_sem = jax.random.normal(k[1], (B, C_bev, Hb, Wb), jnp.float32)
    bev_feat_ins = jax.random.normal(k[2], (B, C_bev, Hb, Wb), jnp.float32)
    pc_coord_bev = jax.random.uniform(k[3], (B, N, 1, 2), jnp.float32, -1.0, 1.0)
    rv_feat_sem = jax.random.normal(k[4], (B, C_rv, Hr, Wr), jnp.float32)
    rv_feat_ins = jax.random.normal(k[5], (B, C_rv, Hr, Wr), jnp.float32)
    pc_coord_rv = jax.random.uniform(k[6], (B, N, 1, 2), jnp.float32, -1.0, 1.0)

    params = init_params(k[7], C_pt, C_bev, C_rv, C_out, n_cls)

    outs = mvfuse_pallas(params, point_feat_tmp, bev_feat_sem, bev_feat_ins,
                         pc_coord_bev, rv_feat_sem, rv_feat_ins, pc_coord_rv)
    outs = jax.block_until_ready(outs)

    refs = mvfuse_reference(params, point_feat_tmp, bev_feat_sem, bev_feat_ins,
                            pc_coord_bev, rv_feat_sem, rv_feat_ins, pc_coord_rv)

    expected_shapes = [(B, C_out, N, 1), (B, n_cls, N, 1), (B, N, 3), (B, N, 1)]
    # bf16 MXU operands (f32 accumulation) -> tolerance relaxed vs the f32 reference.
    for o, r, es in zip(outs, refs, expected_shapes):
        assert o.shape == es, (o.shape, es)
        np.testing.assert_allclose(np.asarray(o), np.asarray(r), atol=3e-2, rtol=3e-2)

    print("KERNEL_OK")
</pallas_src>

<mosaic_0001>
module attributes {stable_mosaic.version = 11 : i64} {
  func.func @_mvfuse_kernel(%arg0: i32, %arg1: i32, %arg2: memref<1x128x32xbf16, #tpu.memory_space<vmem>>, %arg3: memref<1x256x64xbf16, #tpu.memory_space<vmem>>, %arg4: memref<1x256x64xbf16, #tpu.memory_space<vmem>>, %arg5: memref<1x128x2xf32, #tpu.memory_space<vmem>>, %arg6: memref<1x128x2xf32, #tpu.memory_space<vmem>>, %arg7: memref<2x256xf32, #tpu.memory_space<vmem>>, %arg8: memref<2x256xf32, #tpu.memory_space<vmem>>, %arg9: memref<160x128xbf16, #tpu.memory_space<vmem>>, %arg10: memref<128x64xbf16, #tpu.memory_space<vmem>>, %arg11: memref<2x128xf32, #tpu.memory_space<vmem>>, %arg12: memref<1x128x128xf32, #tpu.memory_space<vmem>>) attributes {dimension_semantics = [#tpu.dimension_semantics<parallel>, #tpu.dimension_semantics<parallel>], iteration_bounds = array<i64: 2, 1>, scalar_prefetch = 0 : i64, scratch_operands = 0 : i64, tpu.core_type = #tpu.core_type<tc>, window_params = [{transform_indices = @transform_0, window_bounds = array<i64: 1, 128, 32>}, {transform_indices = @transform_1, window_bounds = array<i64: 1, 256, 64>}, {transform_indices = @transform_2, window_bounds = array<i64: 1, 256, 64>}, {transform_indices = @transform_3, window_bounds = array<i64: 1, 128, 2>}, {transform_indices = @transform_4, window_bounds = array<i64: 1, 128, 2>}, {pipeline_mode = #tpu.pipeline_mode<synchronous>, transform_indices = @transform_5, window_bounds = array<i64: 2, 256>}, {pipeline_mode = #tpu.pipeline_mode<synchronous>, transform_indices = @transform_6, window_bounds = array<i64: 2, 256>}, {pipeline_mode = #tpu.pipeline_mode<synchronous>, transform_indices = @transform_7, window_bounds = array<i64: 160, 128>}, {pipeline_mode = #tpu.pipeline_mode<synchronous>, transform_indices = @transform_8, window_bounds = array<i64: 128, 64>}, {pipeline_mode = #tpu.pipeline_mode<synchronous>, transform_indices = @transform_9, window_bounds = array<i64: 2, 128>}, {transform_indices = @transform_10, window_bounds = array<i64: 1, 128, 128>}]} {
    %c0 = arith.constant 0 : index
    %c0_0 = arith.constant 0 : index
    %c0_1 = arith.constant 0 : index
    %0 = vector.load %arg2[%c0, %c0_0, %c0_1] : memref<1x128x32xbf16, #tpu.memory_space<vmem>>, vector<1x128x32xbf16>
    %1 = vector.shape_cast %0 : vector<1x128x32xbf16> to vector<128x32xbf16>
    %c0_2 = arith.constant 0 : index
    %c0_3 = arith.constant 0 : index
    %c0_4 = arith.constant 0 : index
    %2 = vector.load %arg5[%c0_2, %c0_3, %c0_4] : memref<1x128x2xf32, #tpu.memory_space<vmem>>, vector<1x128x2xf32>
    %3 = vector.shape_cast %2 : vector<1x128x2xf32> to vector<128x2xf32>
    %4 = vector.extract_strided_slice %3 {offsets = [0, 0], sizes = [128, 1], strides = [1, 1]} : vector<128x2xf32> to vector<128x1xf32>
    %cst = arith.constant 1.000000e+00 : f32
    %5 = vector.broadcast %cst : f32 to vector<128x1xf32>
    %6 = arith.addf %4, %5 : vector<128x1xf32>
    %cst_5 = arith.constant 5.000000e-01 : f32
    %7 = vector.broadcast %cst_5 : f32 to vector<128x1xf32>
    %8 = arith.mulf %6, %7 : vector<128x1xf32>
    %cst_6 = arith.constant 1.500000e+01 : f32
    %9 = vector.broadcast %cst_6 : f32 to vector<128x1xf32>
    %10 = arith.mulf %8, %9 : vector<128x1xf32>
    %cst_7 = arith.constant 0.000000e+00 : f32
    %cst_8 = arith.constant 1.500000e+01 : f32
    %11 = vector.broadcast %cst_7 : f32 to vector<128x1xf32>
    %12 = arith.maximumf %11, %10 : vector<128x1xf32>
    %13 = vector.broadcast %cst_8 : f32 to vector<128x1xf32>
    %14 = arith.minimumf %13, %12 : vector<128x1xf32>
    %15 = vector.extract_strided_slice %3 {offsets = [0, 1], sizes = [128, 1], strides = [1, 1]} : vector<128x2xf32> to vector<128x1xf32>
    %cst_9 = arith.constant 1.000000e+00 : f32
    %16 = vector.broadcast %cst_9 : f32 to vector<128x1xf32>
    %17 = arith.addf %15, %16 : vector<128x1xf32>
    %cst_10 = arith.constant 5.000000e-01 : f32
    %18 = vector.broadcast %cst_10 : f32 to vector<128x1xf32>
    %19 = arith.mulf %17, %18 : vector<128x1xf32>
    %cst_11 = arith.constant 1.500000e+01 : f32
    %20 = vector.broadcast %cst_11 : f32 to vector<128x1xf32>
    %21 = arith.mulf %19, %20 : vector<128x1xf32>
    %cst_12 = arith.constant 0.000000e+00 : f32
    %cst_13 = arith.constant 1.500000e+01 : f32
    %22 = vector.broadcast %cst_12 : f32 to vector<128x1xf32>
    %23 = arith.maximumf %22, %21 : vector<128x1xf32>
    %24 = vector.broadcast %cst_13 : f32 to vector<128x1xf32>
    %25 = arith.minimumf %24, %23 : vector<128x1xf32>
    %c0_14 = arith.constant 0 : index
    %c0_15 = arith.constant 0 : index
    %26 = vector.load %arg7[%c0_14, %c0_15] : memref<2x256xf32, #tpu.memory_space<vmem>>, vector<1x256xf32>
    %c1 = arith.constant 1 : index
    %c0_16 = arith.constant 0 : index
    %27 = vector.load %arg7[%c1, %c0_16] : memref<2x256xf32, #tpu.memory_space<vmem>>, vector<1x256xf32>
    %28 = vector.broadcast %26 : vector<1x256xf32> to vector<128x256xf32>
    %29 = vector.broadcast %25 : vector<128x1xf32> to vector<128x256xf32>
    %30 = arith.subf %28, %29 : vector<128x256xf32>
    %31 = math.absf %30 : vector<128x256xf32>
    %cst_17 = arith.constant 1.000000e+00 : f32
    %32 = vector.broadcast %cst_17 : f32 to vector<128x256xf32>
    %33 = arith.subf %32, %31 : vector<128x256xf32>
    %cst_18 = arith.constant 0.000000e+00 : f32
    %34 = vector.broadcast %cst_18 : f32 to vector<128x256xf32>
    %35 = arith.maximumf %33, %34 : vector<128x256xf32>
    %36 = vector.broadcast %27 : vector<1x256xf32> to vector<128x256xf32>
    %37 = vector.broadcast %14 : vector<128x1xf32> to vector<128x256xf32>
    %38 = arith.subf %36, %37 : vector<128x256xf32>
    %39 = math.absf %38 : vector<128x256xf32>
    %cst_19 = arith.constant 1.000000e+00 : f32
    %40 = vector.broadcast %cst_19 : f32 to vector<128x256xf32>
    %41 = arith.subf %40, %39 : vector<128x256xf32>
    %cst_20 = arith.constant 0.000000e+00 : f32
    %42 = vector.broadcast %cst_20 : f32 to vector<128x256xf32>
    %43 = arith.maximumf %41, %42 : vector<128x256xf32>
    %44 = arith.mulf %35, %43 : vector<128x256xf32>
    %45 = arith.truncf %44 : vector<128x256xf32> to vector<128x256xbf16>
    %c0_21 = arith.constant 0 : index
    %c0_22 = arith.constant 0 : index
    %c0_23 = arith.constant 0 : index
    %46 = vector.load %arg3[%c0_21, %c0_22, %c0_23] : memref<1x256x64xbf16, #tpu.memory_space<vmem>>, vector<1x256x64xbf16>
    %47 = vector.shape_cast %46 : vector<1x256x64xbf16> to vector<256x64xbf16>
    %cst_24 = arith.constant dense<0.000000e+00> : vector<128x64xf32>
    %48 = tpu.matmul %45, %47, %cst_24 {dimension_numbers = #tpu.dot_dimension_numbers<[1], [0], [0], [1], [0, 0, 1, 1], [], []>} : vector<128x256xbf16>, vector<256x64xbf16>, vector<128x64xf32> -> vector<128x64xf32>
    %c0_25 = arith.constant 0 : index
    %c0_26 = arith.constant 0 : index
    %c0_27 = arith.constant 0 : index
    %49 = vector.load %arg6[%c0_25, %c0_26, %c0_27] : memref<1x128x2xf32, #tpu.memory_space<vmem>>, vector<1x128x2xf32>
    %50 = vector.shape_cast %49 : vector<1x128x2xf32> to vector<128x2xf32>
    %51 = vector.extract_strided_slice %50 {offsets = [0, 0], sizes = [128, 1], strides = [1, 1]} : vector<128x2xf32> to vector<128x1xf32>
    %cst_28 = arith.constant 1.000000e+00 : f32
    %52 = vector.broadcast %cst_28 : f32 to vector<128x1xf32>
    %53 = arith.addf %51, %52 : vector<128x1xf32>
    %cst_29 = arith.constant 5.000000e-01 : f32
    %54 = vector.broadcast %cst_29 : f32 to vector<128x1xf32>
    %55 = arith.mulf %53, %54 : vector<128x1xf32>
    %cst_30 = arith.constant 3.100000e+01 : f32
    %56 = vector.broadcast %cst_30 : f32 to vector<128x1xf32>
    %57 = arith.mulf %55, %56 : vector<128x1xf32>
    %cst_31 = arith.constant 0.000000e+00 : f32
    %cst_32 = arith.constant 3.100000e+01 : f32
    %58 = vector.broadcast %cst_31 : f32 to vector<128x1xf32>
    %59 = arith.maximumf %58, %57 : vector<128x1xf32>
    %60 = vector.broadcast %cst_32 : f32 to vector<128x1xf32>
    %61 = arith.minimumf %60, %59 : vector<128x1xf32>
    %62 = vector.extract_strided_slice %50 {offsets = [0, 1], sizes = [128, 1], strides = [1, 1]} : vector<128x2xf32> to vector<128x1xf32>
    %cst_33 = arith.constant 1.000000e+00 : f32
    %63 = vector.broadcast %cst_33 : f32 to vector<128x1xf32>
    %64 = arith.addf %62, %63 : vector<128x1xf32>
    %cst_34 = arith.constant 5.000000e-01 : f32
    %65 = vector.broadcast %cst_34 : f32 to vector<128x1xf32>
    %66 = arith.mulf %64, %65 : vector<128x1xf32>
    %cst_35 = arith.constant 7.000000e+00 : f32
    %67 = vector.broadcast %cst_35 : f32 to vector<128x1xf32>
    %68 = arith.mulf %66, %67 : vector<128x1xf32>
    %cst_36 = arith.constant 0.000000e+00 : f32
    %cst_37 = arith.constant 7.000000e+00 : f32
    %69 = vector.broadcast %cst_36 : f32 to vector<128x1xf32>
    %70 = arith.maximumf %69, %68 : vector<128x1xf32>
    %71 = vector.broadcast %cst_37 : f32 to vector<128x1xf32>
    %72 = arith.minimumf %71, %70 : vector<128x1xf32>
    %c0_38 = arith.constant 0 : index
    %c0_39 = arith.constant 0 : index
    %73 = vector.load %arg8[%c0_38, %c0_39] : memref<2x256xf32, #tpu.memory_space<vmem>>, vector<1x256xf32>
    %c1_40 = arith.constant 1 : index
    %c0_41 = arith.constant 0 : index
    %74 = vector.load %arg8[%c1_40, %c0_41] : memref<2x256xf32, #tpu.memory_space<vmem>>, vector<1x256xf32>
    %75 = vector.broadcast %73 : vector<1x256xf32> to vector<128x256xf32>
    %76 = vector.broadcast %72 : vector<128x1xf32> to vector<128x256xf32>
    %77 = arith.subf %75, %76 : vector<128x256xf32>
    %78 = math.absf %77 : vector<128x256xf32>
    %cst_42 = arith.constant 1.000000e+00 : f32
    %79 = vector.broadcast %cst_42 : f32 to vector<128x256xf32>
    %80 = arith.subf %79, %78 : vector<128x256xf32>
    %cst_43 = arith.constant 0.000000e+00 : f32
    %81 = vector.broadcast %cst_43 : f32 to vector<128x256xf32>
    %82 = arith.maximumf %80, %81 : vector<128x256xf32>
    %83 = vector.broadcast %74 : vector<1x256xf32> to vector<128x256xf32>
    %84 = vector.broadcast %61 : vector<128x1xf32> to vector<128x256xf32>
    %85 = arith.subf %83, %84 : vector<128x256xf32>
    %86 = math.absf %85 : vector<128x256xf32>
    %cst_44 = arith.constant 1.000000e+00 : f32
    %87 = vector.broadcast %cst_44 : f32 to vector<128x256xf32>
    %88 = arith.subf %87, %86 : vector<128x256xf32>
    %cst_45 = arith.constant 0.000000e+00 : f32
    %89 = vector.broadcast %cst_45 : f32 to vector<128x256xf32>
    %90 = arith.maximumf %88, %89 : vector<128x256xf32>
    %91 = arith.mulf %82, %90 : vector<128x256xf32>
    %92 = arith.truncf %91 : vector<128x256xf32> to vector<128x256xbf16>
    %c0_46 = arith.constant 0 : index
    %c0_47 = arith.constant 0 : index
    %c0_48 = arith.constant 0 : index
    %93 = vector.load %arg4[%c0_46, %c0_47, %c0_48] : memref<1x256x64xbf16, #tpu.memory_space<vmem>>, vector<1x256x64xbf16>
    %94 = vector.shape_cast %93 : vector<1x256x64xbf16> to vector<256x64xbf16>
    %cst_49 = arith.constant dense<0.000000e+00> : vector<128x64xf32>
    %95 = tpu.matmul %92, %94, %cst_49 {dimension_numbers = #tpu.dot_dimension_numbers<[1], [0], [0], [1], [0, 0, 1, 1], [], []>} : vector<128x256xbf16>, vector<256x64xbf16>, vector<128x64xf32> -> vector<128x64xf32>
    %96 = arith.truncf %48 : vector<128x64xf32> to vector<128x64xbf16>
    %97 = arith.truncf %95 : vector<128x64xf32> to vector<128x64xbf16>
    %98 = tpu.concatenate %1, %96, %97 in 1 : vector<128x32xbf16>, vector<128x64xbf16>, vector<128x64xbf16> -> vector<128x160xbf16>
    %c0_50 = arith.constant 0 : index
    %c0_51 = arith.constant 0 : index
    %99 = vector.load %arg9[%c0_50, %c0_51] : memref<160x128xbf16, #tpu.memory_space<vmem>>, vector<160x128xbf16>
    %cst_52 = arith.constant dense<0.000000e+00> : vector<128x128xf32>
    %100 = tpu.matmul %98, %99, %cst_52 {dimension_numbers = #tpu.dot_dimension_numbers<[1], [0], [0], [1], [0, 0, 1, 1], [], []>} : vector<128x160xbf16>, vector<160x128xbf16>, vector<128x128xf32> -> vector<128x128xf32>
    %c0_53 = arith.constant 0 : index
    %c0_54 = arith.constant 0 : index
    %101 = vector.load %arg11[%c0_53, %c0_54] : memref<2x128xf32, #tpu.memory_space<vmem>>, vector<1x128xf32>
    %102 = vector.broadcast %101 : vector<1x128xf32> to vector<128x128xf32>
    %103 = arith.addf %100, %102 : vector<128x128xf32>
    %cst_55 = arith.constant 0.000000e+00 : f32
    %104 = vector.broadcast %cst_55 : f32 to vector<128x128xf32>
    %105 = arith.maximumf %103, %104 : vector<128x128xf32>
    %106 = arith.truncf %105 : vector<128x128xf32> to vector<128x128xbf16>
    %c0_56 = arith.constant 0 : index
    %c0_57 = arith.constant 0 : index
    %107 = vector.load %arg10[%c0_56, %c0_57] : memref<128x64xbf16, #tpu.memory_space<vmem>>, vector<128x64xbf16>
    %cst_58 = arith.constant dense<0.000000e+00> : vector<128x64xf32>
    %108 = tpu.matmul %106, %107, %cst_58 {dimension_numbers = #tpu.dot_dimension_numbers<[1], [0], [0], [1], [0, 0, 1, 1], [], []>} : vector<128x128xbf16>, vector<128x64xbf16>, vector<128x64xf32> -> vector<128x64xf32>
    %c1_59 = arith.constant 1 : index
    %c0_60 = arith.constant 0 : index
    %109 = vector.load %arg11[%c1_59, %c0_60] : memref<2x128xf32, #tpu.memory_space<vmem>>, vector<1x64xf32>
    %110 = vector.broadcast %109 : vector<1x64xf32> to vector<128x64xf32>
    %111 = arith.addf %108, %110 : vector<128x64xf32>
    %112 = vector.extract_strided_slice %105 {offsets = [0, 0], sizes = [128, 64], strides = [1, 1]} : vector<128x128xf32> to vector<128x64xf32>
    %113 = tpu.concatenate %112, %111 in 1 : vector<128x64xf32>, vector<128x64xf32> -> vector<128x128xf32>
    %c0_61 = arith.constant 0 : index
    %c0_62 = arith.constant 0 : index
    %c0_63 = arith.constant 0 : index
    %114 = vector.load %arg12[%c0_61, %c0_62, %c0_63] : memref<1x128x128xf32, #tpu.memory_space<vmem>>, vector<1x128x128xf32>
    %115 = vector.shape_cast %114 : vector<1x128x128xf32> to vector<128x128xf32>
    %116 = vector.shape_cast %113 : vector<128x128xf32> to vector<1x128x128xf32>
    tpu.vector_store %arg12[%c0_61, %c0_62, %c0_63], %116 {strides = array<i32>} : memref<1x128x128xf32, #tpu.memory_space<vmem>>, vector<1x128x128xf32>,
    return
  }
  func.func @transform_0(%arg0: i32, %arg1: i32) -> (i32, i32, i32) {
    %c0_i32 = arith.constant 0 : i32
    %c0_i32_0 = arith.constant 0 : i32
    return %arg0, %arg1, %c0_i32 : i32, i32, i32
  }
  func.func @transform_1(%arg0: i32, %arg1: i32) -> (i32, i32, i32) {
    %c0_i32 = arith.constant 0 : i32
    %c0_i32_0 = arith.constant 0 : i32
    %c0_i32_1 = arith.constant 0 : i32
    return %arg0, %c0_i32, %c0_i32_0 : i32, i32, i32
  }
  func.func @transform_2(%arg0: i32, %arg1: i32) -> (i32, i32, i32) {
    %c0_i32 = arith.constant 0 : i32
    %c0_i32_0 = arith.constant 0 : i32
    %c0_i32_1 = arith.constant 0 : i32
    return %arg0, %c0_i32, %c0_i32_0 : i32, i32, i32
  }
  func.func @transform_3(%arg0: i32, %arg1: i32) -> (i32, i32, i32) {
    %c0_i32 = arith.constant 0 : i32
    %c0_i32_0 = arith.constant 0 : i32
    return %arg0, %arg1, %c0_i32 : i32, i32, i32
  }
  func.func @transform_4(%arg0: i32, %arg1: i32) -> (i32, i32, i32) {
    %c0_i32 = arith.constant 0 : i32
    %c0_i32_0 = arith.constant 0 : i32
    return %arg0, %arg1, %c0_i32 : i32, i32, i32
  }
  func.func @transform_5(%arg0: i32, %arg1: i32) -> (i32, i32) {
    %c0_i32 = arith.constant 0 : i32
    %c0_i32_0 = arith.constant 0 : i32
    %c0_i32_1 = arith.constant 0 : i32
    return %c0_i32, %c0_i32_0 : i32, i32
  }
  func.func @transform_6(%arg0: i32, %arg1: i32) -> (i32, i32) {
    %c0_i32 = arith.constant 0 : i32
    %c0_i32_0 = arith.constant 0 : i32
    %c0_i32_1 = arith.constant 0 : i32
    return %c0_i32, %c0_i32_0 : i32, i32
  }
  func.func @transform_7(%arg0: i32, %arg1: i32) -> (i32, i32) {
    %c0_i32 = arith.constant 0 : i32
    %c0_i32_0 = arith.constant 0 : i32
    %c0_i32_1 = arith.constant 0 : i32
    return %c0_i32, %c0_i32_0 : i32, i32
  }
  func.func @transform_8(%arg0: i32, %arg1: i32) -> (i32, i32) {
    %c0_i32 = arith.constant 0 : i32
    %c0_i32_0 = arith.constant 0 : i32
    %c0_i32_1 = arith.constant 0 : i32
    return %c0_i32, %c0_i32_0 : i32, i32
  }
  func.func @transform_9(%arg0: i32, %arg1: i32) -> (i32, i32) {
    %c0_i32 = arith.constant 0 : i32
    %c0_i32_0 = arith.constant 0 : i32
    %c0_i32_1 = arith.constant 0 : i32
    return %c0_i32, %c0_i32_0 : i32, i32
  }
  func.func @transform_10(%arg0: i32, %arg1: i32) -> (i32, i32, i32) {
    %c0_i32 = arith.constant 0 : i32
    %c0_i32_0 = arith.constant 0 : i32
    return %arg0, %arg1, %c0_i32 : i32, i32, i32
  }
}

</mosaic_0001>

<llo_original>
// kernel: tpu_custom_call.1
$region0: #{tpu_custom_call.1}
  #allocation0 [shape = 'u32[]', space=smem, size = 0x4, offset = 0x4, fixed_abs, tag = 'smem constant byte address 0x4 - core index']
  #allocation1 [shape = 'u32[72,128]{1,0:T(1,128)}', space=vmem, size = 0x9000, scoped, tag = 'internal scratch']
  %s0 = inlined_call_operand.vmem [shape: bf16[2,128,32], index: 0, kind: input, shape index: {}]
  %s1 = inlined_call_operand.vmem [shape: bf16[2,256,64], index: 1, kind: input, shape index: {}]
  %s2 = inlined_call_operand.vmem [shape: bf16[2,256,64], index: 2, kind: input, shape index: {}]
  %s3 = inlined_call_operand.vmem [shape: f32[2,128,2], index: 3, kind: input, shape index: {}]
  %s4 = inlined_call_operand.vmem [shape: f32[2,128,2], index: 4, kind: input, shape index: {}]
  %s5 = inlined_call_operand.vmem [shape: f32[2,256], index: 5, kind: input, shape index: {}]
  %s6 = inlined_call_operand.vmem [shape: f32[2,256], index: 6, kind: input, shape index: {}]
  %s7 = inlined_call_operand.vmem [shape: bf16[160,128], index: 7, kind: input, shape index: {}]
  %s8 = inlined_call_operand.vmem [shape: bf16[128,64], index: 8, kind: input, shape index: {}]
  %s9 = inlined_call_operand.vmem [shape: f32[2,128], index: 9, kind: input, shape index: {}]
  %s10 = inlined_call_operand.hbm [shape: f32[2,128,128], index: 10, kind: output, shape index: {}]
  %s11 = sld [smem:[#allocation0]]
  $region73: #{tpu_custom_call.1} parent=0
    _
  %s13 = ssub.s32 1, %s11
  %s14 = scalar_select 0, %s13, %s11
  $region1: #{tpu_custom_call.1} parent=0
    #allocation2 [shape = 'u8[131072]{0}', space=vmem, size = 0x20000, scoped, tag = 'output window, operand 0']
    #allocation3 [shape = 's32[2]{0}', space=sflag, size = 0x8, scoped, tag = 'scoped memory for tpu_custom_call.1']
    %15 = vsyncpa [#allocation3], 0
    %s16 = scalar_lea.sflag [#allocation3], 1
    %17 = vsyncpa %s16, 0
    loop: start=0, step=1, limit=4
    $region2: #{tpu_custom_call.1} parent=1 // loop_pre_header
      _
    $region3: #{tpu_custom_call.1} parent=1 // loop_header
      %s19 = sphi 0, %s23
      %p20 = scmp.ge.s32.totalorder %s19, 4
      %s26 = sphi 0, %s38
      %s27 = sphi 0, %s34
      %s28 = sphi 0, %s26
      %s29 = sphi 0, %s27
      %s30 = sphi 0, %s28
      %s31 = sphi 0, %s29
      %s43 = sphi 0, %s45
      %s46 = sphi 0, %s43
      %s47 = sphi 0, %s46
      %s63 = sphi 0, %s47
      %s69 = sphi 0, %s71
      %s72 = sphi 0, %s69
      %s73 = sphi 0, %s72
      %s89 = sphi 0, %s73
      %s95 = sphi 0, %s97
      %s98 = sphi 0, %s95
      %s99 = sphi 0, %s98
      %s115 = sphi 0, %s99
      %s123 = sphi 0, %s125
      %s126 = sphi 0, %s123
      %s127 = sphi 0, %s126
      %s143 = sphi 0, %s127
      %s151 = sphi 0, %s153
      %s154 = sphi 0, %s151
      %s155 = sphi 0, %s154
      %s171 = sphi 0, %s155
      %s175 = sphi 0, %s175
      %s177 = sphi 0, %s175
      %s178 = sphi 0, %s177
      %s192 = sphi 0, %s178
      %s196 = sphi 0, %s196
      %s198 = sphi 0, %s196
      %s199 = sphi 0, %s198
      %s213 = sphi 0, %s199
      %s217 = sphi 0, %s217
      %s219 = sphi 0, %s217
      %s220 = sphi 0, %s219
      %s234 = sphi 0, %s220
      %s238 = sphi 0, %s238
      %s240 = sphi 0, %s238
      %s241 = sphi 0, %s240
      %s255 = sphi 0, %s241
      %s259 = sphi 0, %s259
      %s261 = sphi 0, %s259
      %s262 = sphi 0, %s261
      %s276 = sphi 0, %s262
      %s284 = sphi 0, %s286
      %s287 = sphi 0, %s284
      %s288 = sphi 0, %s287
      %s304 = sphi 0, %s288
    $region4: #{tpu_custom_call.1} parent=1 // loop_header_branch
      %22 = sbr.rel (%p20) target = $region8
    $region5: #{tpu_custom_call.1} parent=1 // loop_body
      %s24 = ssub.s32 %s19, 1
      %s25 = ssub.s32 %s19, 2
      %s32 = sadd.s32 1, %s27
      %p33 = scmp.ge.s32.totalorder %s32, 1
      %s34 = scalar_select %p33, 0, %s32
      %s35 = sadd.s32 1, %s26
      %s36 = scalar_select %p33, %s35, %s26
      %p37 = scmp.ge.s32.totalorder %s36, 2
      %s38 = scalar_select %p37, 0, %s36
      %s39 = ssub.s32 %s26, %s38
      %s40 = ssub.s32 %s27, %s34
      %s41 = sor.u32 %s39, %s40
      %p42 = scmp.eq.s32.totalorder %s41, 0
      %s44 = sadd.s32 %s43, 1
      %s45 = scalar_select %p42, %s43, %s44
      %p48 = pneg %p42
      %p49 = scmp.eq.s32.totalorder %s19, 1
      %p50 = por %p48, %p49
      %p51 = scmp.ne.s32.totalorder %s43, %s46
      %p52 = scmp.eq.s32.totalorder %s19, 0
      %p53 = por %p51, %p52
      %p54 = scmp.ne.s32.totalorder %s43, %s46
      %p55 = scmp.eq.s32.totalorder %s24, 1
      %p56 = por %p54, %p55
      %p57 = scmp.ne.s32.totalorder %s46, %s47
      %p58 = scmp.eq.s32.totalorder %s24, 0
      %p59 = por %p57, %p58
      %p60 = scmp.ne.s32.totalorder %s46, %s47
      %p61 = scmp.eq.s32.totalorder %s25, 1
      %p62 = por %p60, %p61
      %p64 = scmp.ne.s32.totalorder %s47, %s63
      %p65 = scmp.eq.s32.totalorder %s25, 0
      %p66 = por %p64, %p65
      %s67 = ssub.s32 %s26, %s38
      %p68 = scmp.eq.s32.totalorder %s67, 0
      %s70 = sadd.s32 %s69, 1
      %s71 = scalar_select %p68, %s69, %s70
      %p74 = pneg %p68
      %p75 = scmp.eq.s32.totalorder %s19, 1
      %p76 = por %p74, %p75
      %p77 = scmp.ne.s32.totalorder %s69, %s72
      %p78 = scmp.eq.s32.totalorder %s19, 0
      %p79 = por %p77, %p78
      %p80 = scmp.ne.s32.totalorder %s69, %s72
      %p81 = scmp.eq.s32.totalorder %s24, 1
      %p82 = por %p80, %p81
      %p83 = scmp.ne.s32.totalorder %s72, %s73
      %p84 = scmp.eq.s32.totalorder %s24, 0
      %p85 = por %p83, %p84
      %p86 = scmp.ne.s32.totalorder %s72, %s73
      %p87 = scmp.eq.s32.totalorder %s25, 1
      %p88 = por %p86, %p87
      %p90 = scmp.ne.s32.totalorder %s73, %s89
      %p91 = scmp.eq.s32.totalorder %s25, 0
      %p92 = por %p90, %p91
      %s93 = ssub.s32 %s26, %s38
      %p94 = scmp.eq.s32.totalorder %s93, 0
      %s96 = sadd.s32 %s95, 1
      %s97 = scalar_select %p94, %s95, %s96
      %p100 = pneg %p94
      %p101 = scmp.eq.s32.totalorder %s19, 1
      %p102 = por %p100, %p101
      %p103 = scmp.ne.s32.totalorder %s95, %s98
      %p104 = scmp.eq.s32.totalorder %s19, 0
      %p105 = por %p103, %p104
      %p106 = scmp.ne.s32.totalorder %s95, %s98
      %p107 = scmp.eq.s32.totalorder %s24, 1
      %p108 = por %p106, %p107
      %p109 = scmp.ne.s32.totalorder %s98, %s99
      %p110 = scmp.eq.s32.totalorder %s24, 0
      %p111 = por %p109, %p110
      %p112 = scmp.ne.s32.totalorder %s98, %s99
      %p113 = scmp.eq.s32.totalorder %s25, 1
      %p114 = por %p112, %p113
      %p116 = scmp.ne.s32.totalorder %s99, %s115
      %p117 = scmp.eq.s32.totalorder %s25, 0
      %p118 = por %p116, %p117
      %s119 = ssub.s32 %s26, %s38
      %s120 = ssub.s32 %s27, %s34
      %s121 = sor.u32 %s119, %s120
      %p122 = scmp.eq.s32.totalorder %s121, 0
      %s124 = sadd.s32 %s123, 1
      %s125 = scalar_select %p122, %s123, %s124
      %p128 = pneg %p122
      %p129 = scmp.eq.s32.totalorder %s19, 1
      %p130 = por %p128, %p129
      %p131 = scmp.ne.s32.totalorder %s123, %s126
      %p132 = scmp.eq.s32.totalorder %s19, 0
      %p133 = por %p131, %p132
      %p134 = scmp.ne.s32.totalorder %s123, %s126
      %p135 = scmp.eq.s32.totalorder %s24, 1
      %p136 = por %p134, %p135
      %p137 = scmp.ne.s32.totalorder %s126, %s127
      %p138 = scmp.eq.s32.totalorder %s24, 0
      %p139 = por %p137, %p138
      %p140 = scmp.ne.s32.totalorder %s126, %s127
      %p141 = scmp.eq.s32.totalorder %s25, 1
      %p142 = por %p140, %p141
      %p144 = scmp.ne.s32.totalorder %s127, %s143
      %p145 = scmp.eq.s32.totalorder %s25, 0
      %p146 = por %p144, %p145
      %s147 = ssub.s32 %s26, %s38
      %s148 = ssub.s32 %s27, %s34
      %s149 = sor.u32 %s147, %s148
      %p150 = scmp.eq.s32.totalorder %s149, 0
      %s152 = sadd.s32 %s151, 1
      %s153 = scalar_select %p150, %s151, %s152
      %p156 = pneg %p150
      %p157 = scmp.eq.s32.totalorder %s19, 1
      %p158 = por %p156, %p157
      %p159 = scmp.ne.s32.totalorder %s151, %s154
      %p160 = scmp.eq.s32.totalorder %s19, 0
      %p161 = por %p159, %p160
      %p162 = scmp.ne.s32.totalorder %s151, %s154
      %p163 = scmp.eq.s32.totalorder %s24, 1
      %p164 = por %p162, %p163
      %p165 = scmp.ne.s32.totalorder %s154, %s155
      %p166 = scmp.eq.s32.totalorder %s24, 0
      %p167 = por %p165, %p166
      %p168 = scmp.ne.s32.totalorder %s154, %s155
      %p169 = scmp.eq.s32.totalorder %s25, 1
      %p170 = por %p168, %p169
      %p172 = scmp.ne.s32.totalorder %s155, %s171
      %p173 = scmp.eq.s32.totalorder %s25, 0
      %p174 = por %p172, %p173
      %s176 = sadd.s32 %s175, 1
      %p179 = scmp.eq.s32.totalorder %s19, 1
      %p180 = scmp.ne.s32.totalorder %s175, %s177
      %p181 = scmp.eq.s32.totalorder %s19, 0
      %p182 = por %p180, %p181
      %p183 = scmp.ne.s32.totalorder %s175, %s177
      %p184 = scmp.eq.s32.totalorder %s24, 1
      %p185 = por %p183, %p184
      %p186 = scmp.ne.s32.totalorder %s177, %s178
      %p187 = scmp.eq.s32.totalorder %s24, 0
      %p188 = por %p186, %p187
      %p189 = scmp.ne.s32.totalorder %s177, %s178
      %p190 = scmp.eq.s32.totalorder %s25, 1
      %p191 = por %p189, %p190
      %p193 = scmp.ne.s32.totalorder %s178, %s192
      %p194 = scmp.eq.s32.totalorder %s25, 0
      %p195 = por %p193, %p194
      %s197 = sadd.s32 %s196, 1
      %p200 = scmp.eq.s32.totalorder %s19, 1
      %p201 = scmp.ne.s32.totalorder %s196, %s198
      %p202 = scmp.eq.s32.totalorder %s19, 0
      %p203 = por %p201, %p202
      %p204 = scmp.ne.s32.totalorder %s196, %s198
      %p205 = scmp.eq.s32.totalorder %s24, 1
      %p206 = por %p204, %p205
      %p207 = scmp.ne.s32.totalorder %s198, %s199
      %p208 = scmp.eq.s32.totalorder %s24, 0
      %p209 = por %p207, %p208
      %p210 = scmp.ne.s32.totalorder %s198, %s199
      %p211 = scmp.eq.s32.totalorder %s25, 1
      %p212 = por %p210, %p211
      %p214 = scmp.ne.s32.totalorder %s199, %s213
      %p215 = scmp.eq.s32.totalorder %s25, 0
      %p216 = por %p214, %p215
      %s218 = sadd.s32 %s217, 1
      %p221 = scmp.eq.s32.totalorder %s19, 1
      %p222 = scmp.ne.s32.totalorder %s217, %s219
      %p223 = scmp.eq.s32.totalorder %s19, 0
      %p224 = por %p222, %p223
      %p225 = scmp.ne.s32.totalorder %s217, %s219
      %p226 = scmp.eq.s32.totalorder %s24, 1
      %p227 = por %p225, %p226
      %p228 = scmp.ne.s32.totalorder %s219, %s220
      %p229 = scmp.eq.s32.totalorder %s24, 0
      %p230 = por %p228, %p229
      %p231 = scmp.ne.s32.totalorder %s219, %s220
      %p232 = scmp.eq.s32.totalorder %s25, 1
      %p233 = por %p231, %p232
      %p235 = scmp.ne.s32.totalorder %s220, %s234
      %p236 = scmp.eq.s32.totalorder %s25, 0
      %p237 = por %p235, %p236
      %s239 = sadd.s32 %s238, 1
      %p242 = scmp.eq.s32.totalorder %s19, 1
      %p243 = scmp.ne.s32.totalorder %s238, %s240
      %p244 = scmp.eq.s32.totalorder %s19, 0
      %p245 = por %p243, %p244
      %p246 = scmp.ne.s32.totalorder %s238, %s240
      %p247 = scmp.eq.s32.totalorder %s24, 1
      %p248 = por %p246, %p247
      %p249 = scmp.ne.s32.totalorder %s240, %s241
      %p250 = scmp.eq.s32.totalorder %s24, 0
      %p251 = por %p249, %p250
      %p252 = scmp.ne.s32.totalorder %s240, %s241
      %p253 = scmp.eq.s32.totalorder %s25, 1
      %p254 = por %p252, %p253
      %p256 = scmp.ne.s32.totalorder %s241, %s255
      %p257 = scmp.eq.s32.totalorder %s25, 0
      %p258 = por %p256, %p257
      %s260 = sadd.s32 %s259, 1
      %p263 = scmp.eq.s32.totalorder %s19, 1
      %p264 = scmp.ne.s32.totalorder %s259, %s261
      %p265 = scmp.eq.s32.totalorder %s19, 0
      %p266 = por %p264, %p265
      %p267 = scmp.ne.s32.totalorder %s259, %s261
      %p268 = scmp.eq.s32.totalorder %s24, 1
      %p269 = por %p267, %p268
      %p270 = scmp.ne.s32.totalorder %s261, %s262
      %p271 = scmp.eq.s32.totalorder %s24, 0
      %p272 = por %p270, %p271
      %p273 = scmp.ne.s32.totalorder %s261, %s262
      %p274 = scmp.eq.s32.totalorder %s25, 1
      %p275 = por %p273, %p274
      %p277 = scmp.ne.s32.totalorder %s262, %s276
      %p278 = scmp.eq.s32.totalorder %s25, 0
      %p279 = por %p277, %p278
      %s280 = ssub.s32 %s26, %s38
      %s281 = ssub.s32 %s27, %s34
      %s282 = sor.u32 %s280, %s281
      %p283 = scmp.eq.s32.totalorder %s282, 0
      %s285 = sadd.s32 %s284, 1
      %s286 = scalar_select %p283, %s284, %s285
      %p289 = pneg %p283
      %p290 = scmp.eq.s32.totalorder %s19, 1
      %p291 = por %p289, %p290
      %p292 = scmp.ne.s32.totalorder %s284, %s287
      %p293 = scmp.eq.s32.totalorder %s19, 0
      %p294 = por %p292, %p293
      %p295 = scmp.ne.s32.totalorder %s284, %s287
      %p296 = scmp.eq.s32.totalorder %s24, 1
      %p297 = por %p295, %p296
      %p298 = scmp.ne.s32.totalorder %s287, %s288
      %p299 = scmp.eq.s32.totalorder %s24, 0
      %p300 = por %p298, %p299
      %p301 = scmp.ne.s32.totalorder %s287, %s288
      %p302 = scmp.eq.s32.totalorder %s25, 1
      %p303 = por %p301, %p302
      %p305 = scmp.ne.s32.totalorder %s288, %s304
      %p306 = scmp.eq.s32.totalorder %s25, 0
      %p307 = por %p305, %p306
      %p308 = scmp.le.s32.totalorder 1, %s19
      %p309 = scmp.lt.s32.totalorder %s19, 3
      %p310 = pnand %p308, %p309
      %p311 = pneg %p310
      // Predicated region
      $region9: #{tpu_custom_call.1} parent=5 // pred_check
        _
      $region10: #{tpu_custom_call.1} parent=5 // pred_check_branch
        %313 = sbr.rel (%p310) target = $region12
      $region11: #{tpu_custom_call.1} parent=5 // pred_region
        %s314 = ssub.s32 %s19, 1
        // Predicated region
        $region13: #{tpu_custom_call.1} parent=11 // pred_check
          %p315 = pneg %p188
        $region14: #{tpu_custom_call.1} parent=11 // pred_check_branch
          %317 = sbr.rel (%p315) target = $region16
        $region15: #{tpu_custom_call.1} parent=11 // pred_region
          _
        $region16: #{tpu_custom_call.1} parent=11 // pred_fallthru
          _
        // Predicated region
        $region17: #{tpu_custom_call.1} parent=11 // pred_check
          %p318 = pneg %p209
        $region18: #{tpu_custom_call.1} parent=11 // pred_check_branch
          %320 = sbr.rel (%p318) target = $region20
        $region19: #{tpu_custom_call.1} parent=11 // pred_region
          _
        $region20: #{tpu_custom_call.1} parent=11 // pred_fallthru
          _
        // Predicated region
        $region21: #{tpu_custom_call.1} parent=11 // pred_check
          %p321 = pneg %p230
        $region22: #{tpu_custom_call.1} parent=11 // pred_check_branch
          %323 = sbr.rel (%p321) target = $region24
        $region23: #{tpu_custom_call.1} parent=11 // pred_region
          _
        $region24: #{tpu_custom_call.1} parent=11 // pred_fallthru
          _
        // Predicated region
        $region25: #{tpu_custom_call.1} parent=11 // pred_check
          %p324 = pneg %p251
        $region26: #{tpu_custom_call.1} parent=11 // pred_check_branch
          %326 = sbr.rel (%p324) target = $region28
        $region27: #{tpu_custom_call.1} parent=11 // pred_region
          _
        $region28: #{tpu_custom_call.1} parent=11 // pred_fallthru
          _
        // Predicated region
        $region29: #{tpu_custom_call.1} parent=11 // pred_check
          %p327 = pneg %p272
        $region30: #{tpu_custom_call.1} parent=11 // pred_check_branch
          %329 = sbr.rel (%p327) target = $region32
        $region31: #{tpu_custom_call.1} parent=11 // pred_region
          _
        $region32: #{tpu_custom_call.1} parent=11 // pred_fallthru
          _
      $region12: #{tpu_custom_call.1} parent=5 // pred_fallthru
        _
      %p330 = scmp.lt.s32.totalorder %s19, 2
      // Predicated region
      $region33: #{tpu_custom_call.1} parent=5 // pred_check
        %p331 = pneg %p330
      $region34: #{tpu_custom_call.1} parent=5 // pred_check_branch
        %333 = sbr.rel (%p331) target = $region36
      $region35: #{tpu_custom_call.1} parent=5 // pred_region
        // Predicated region
        $region37: #{tpu_custom_call.1} parent=35 // pred_check
          %p334 = pneg %p53
        $region38: #{tpu_custom_call.1} parent=35 // pred_check_branch
          %336 = sbr.rel (%p334) target = $region40
        $region39: #{tpu_custom_call.1} parent=35 // pred_region
          %s337 = smul.u32 16, %s27
          %p338 = scmp.lt.s32.totalorder %s26, 1
          %s339 = scalar_select %p338, %s26, 1
          %p340 = scmp.lt.s32.totalorder %s337, 15
          %s341 = scalar_select %p340, %s337, 15
          %s342 = smul.addr %s339, 16
          %s343 = sadd.s32 %s341, %s342
          %s344 = smul.addr %s343, 4
          %s345 = scalar_lea.vmem %s0, %s344
          %s346 = smul.u32 16, %s27
        $region40: #{tpu_custom_call.1} parent=35 // pred_fallthru
          _
        // Predicated region
        $region41: #{tpu_custom_call.1} parent=35 // pred_check
          %p347 = pneg %p79
        $region42: #{tpu_custom_call.1} parent=35 // pred_check_branch
          %349 = sbr.rel (%p347) target = $region44
        $region43: #{tpu_custom_call.1} parent=35 // pred_region
          %p350 = scmp.lt.s32.totalorder %s26, 1
          %s351 = scalar_select %p350, %s26, 1
          %s352 = smul.addr %s351, 32
          %s353 = smul.addr %s352, 4
          %s354 = scalar_lea.vmem %s1, %s353
        $region44: #{tpu_custom_call.1} parent=35 // pred_fallthru
          _
        // Predicated region
        $region45: #{tpu_custom_call.1} parent=35 // pred_check
          %p355 = pneg %p105
        $region46: #{tpu_custom_call.1} parent=35 // pred_check_branch
          %357 = sbr.rel (%p355) target = $region48
        $region47: #{tpu_custom_call.1} parent=35 // pred_region
          %p358 = scmp.lt.s32.totalorder %s26, 1
          %s359 = scalar_select %p358, %s26, 1
          %s360 = smul.addr %s359, 32
          %s361 = smul.addr %s360, 4
          %s362 = scalar_lea.vmem %s2, %s361
        $region48: #{tpu_custom_call.1} parent=35 // pred_fallthru
          _
        // Predicated region
        $region49: #{tpu_custom_call.1} parent=35 // pred_check
          %p363 = pneg %p133
        $region50: #{tpu_custom_call.1} parent=35 // pred_check_branch
          %365 = sbr.rel (%p363) target = $region52
        $region51: #{tpu_custom_call.1} parent=35 // pred_region
          %s366 = smul.u32 16, %s27
          %p367 = scmp.lt.s32.totalorder %s26, 1
          %s368 = scalar_select %p367, %s26, 1
          %p369 = scmp.lt.s32.totalorder %s366, 15
          %s370 = scalar_select %p369, %s366, 15
          %s371 = smul.addr %s368, 16
          %s372 = sadd.s32 %s370, %s371
          %s373 = smul.addr %s372, 8
          %s374 = scalar_lea.vmem %s3, %s373
          %s375 = smul.u32 16, %s27
        $region52: #{tpu_custom_call.1} parent=35 // pred_fallthru
          _
        // Predicated region
        $region53: #{tpu_custom_call.1} parent=35 // pred_check
          %p376 = pneg %p161
        $region54: #{tpu_custom_call.1} parent=35 // pred_check_branch
          %378 = sbr.rel (%p376) target = $region56
        $region55: #{tpu_custom_call.1} parent=35 // pred_region
          %s379 = smul.u32 16, %s27
          %p380 = scmp.lt.s32.totalorder %s26, 1
          %s381 = scalar_select %p380, %s26, 1
          %p382 = scmp.lt.s32.totalorder %s379, 15
          %s383 = scalar_select %p382, %s379, 15
          %s384 = smul.addr %s381, 16
          %s385 = sadd.s32 %s383, %s384
          %s386 = smul.addr %s385, 8
          %s387 = scalar_lea.vmem %s4, %s386
          %s388 = smul.u32 16, %s27
        $region56: #{tpu_custom_call.1} parent=35 // pred_fallthru
          _
      $region36: #{tpu_custom_call.1} parent=5 // pred_fallthru
        _
      %p389 = scmp.le.s32.totalorder 1, %s19
      %p390 = scmp.lt.s32.totalorder %s19, 3
      %p391 = pnand %p389, %p390
      %p392 = pneg %p391
      // Predicated region
      $region57: #{tpu_custom_call.1} parent=5 // pred_check
        _
      $region58: #{tpu_custom_call.1} parent=5 // pred_check_branch
        %394 = sbr.rel (%p391) target = $region60
      $region59: #{tpu_custom_call.1} parent=5 // pred_region
        %s395 = ssub.s32 %s19, 1
        %s396 = smul.u32 16, %s29
        %p397 = scmp.lt.s32.totalorder %s28, 1
        %s398 = scalar_select %p397, %s28, 1
        %p399 = scmp.lt.s32.totalorder %s396, 15
        %s400 = scalar_select %p399, %s396, 15
        %s401 = smul.addr %s398, 16
        %s402 = sadd.s32 %s400, %s401
        %s403 = smul.addr %s402, 4
        %s404 = scalar_lea.vmem %s0, %s403
        %p405 = pneg %p59
        %p406 = pneg %p56
        %p407 = scmp.lt.s32.totalorder %s28, 1
        %s408 = scalar_select %p407, %s28, 1
        %s409 = smul.addr %s408, 32
        %s410 = smul.addr %s409, 4
        %s411 = scalar_lea.vmem %s1, %s410
        %p412 = pneg %p85
        %p413 = pneg %p82
        %p414 = scmp.lt.s32.totalorder %s28, 1
        %s415 = scalar_select %p414, %s28, 1
        %s416 = smul.addr %s415, 32
        %s417 = smul.addr %s416, 4
        %s418 = scalar_lea.vmem %s2, %s417
        %p419 = pneg %p111
        %p420 = pneg %p108
        %s421 = smul.u32 16, %s29
        %p422 = scmp.lt.s32.totalorder %s28, 1
        %s423 = scalar_select %p422, %s28, 1
        %p424 = scmp.lt.s32.totalorder %s421, 15
        %s425 = scalar_select %p424, %s421, 15
        %s426 = smul.addr %s423, 16
        %s427 = sadd.s32 %s425, %s426
        %s428 = smul.addr %s427, 8
        %s429 = scalar_lea.vmem %s3, %s428
        %p430 = pneg %p139
        %p431 = pneg %p136
        %s432 = smul.u32 16, %s29
        %p433 = scmp.lt.s32.totalorder %s28, 1
        %s434 = scalar_select %p433, %s28, 1
        %p435 = scmp.lt.s32.totalorder %s432, 15
        %s436 = scalar_select %p435, %s432, 15
        %s437 = smul.addr %s434, 16
        %s438 = sadd.s32 %s436, %s437
        %s439 = smul.addr %s438, 8
        %s440 = scalar_lea.vmem %s4, %s439
        %p441 = pneg %p167
        %p442 = pneg %p164
        %p443 = pneg %p188
        %p444 = pneg %p185
        %p445 = pneg %p209
        %p446 = pneg %p206
        %p447 = pneg %p230
        %p448 = pneg %p227
        %p449 = pneg %p251
        %p450 = pneg %p248
        %p451 = pneg %p272
        %p452 = pneg %p269
        %p453 = pneg %p300
        %p454 = pneg %p297
        %s455 = sand.u32 %s287, 1
        %s456 = scalar_lea.sflag [#allocation3], %s455
        %s457 = sand.u32 %s287, 1
        %s458 = smul.addr %s457, 128
        %s459 = scalar_lea.vmem [#allocation2], %s458
        %s460 = smul.u32 16, %s29
        %p461 = scmp.lt.s32.totalorder %s28, 1
        %s462 = scalar_select %p461, %s28, 1
        %p463 = scmp.lt.s32.totalorder %s460, 15
        %s464 = scalar_select %p463, %s460, 15
        %s465 = smul.addr %s462, 16
        %s466 = sadd.s32 %s464, %s465
        %s467 = smul.addr %s466, 4
        %s468 = scalar_lea.vmem %s0, %s467
        %s469 = smul.u32 16, %s29
        %p470 = scmp.lt.s32.totalorder %s28, 1
        %s471 = scalar_select %p470, %s28, 1
        %s472 = smul.addr %s471, 32
        %s473 = smul.addr %s472, 4
        %s474 = scalar_lea.vmem %s1, %s473
        %p475 = scmp.lt.s32.totalorder %s28, 1
        %s476 = scalar_select %p475, %s28, 1
        %s477 = smul.addr %s476, 32
        %s478 = smul.addr %s477, 4
        %s479 = scalar_lea.vmem %s2, %s478
        %s480 = smul.u32 16, %s29
        %p481 = scmp.lt.s32.totalorder %s28, 1
        %s482 = scalar_select %p481, %s28, 1
        %p483 = scmp.lt.s32.totalorder %s480, 15
        %s484 = scalar_select %p483, %s480, 15
        %s485 = smul.addr %s482, 16
        %s486 = sadd.s32 %s484, %s485
        %s487 = smul.addr %s486, 8
        %s488 = scalar_lea.vmem %s3, %s487
        %s489 = smul.u32 16, %s29
        %s490 = smul.u32 16, %s29
        %p491 = scmp.lt.s32.totalorder %s28, 1
        %s492 = scalar_select %p491, %s28, 1
        %p493 = scmp.lt.s32.totalorder %s490, 15
        %s494 = scalar_select %p493, %s490, 15
        %s495 = smul.addr %s492, 16
        %s496 = sadd.s32 %s494, %s495
        %s497 = smul.addr %s496, 8
        %s498 = scalar_lea.vmem %s4, %s497
        %s499 = smul.u32 16, %s29
        %s500 = smul.u32 16, %s29
        %v502 = vld [vmem:[%s468] sm:$0xf]
        %v503 = vld [vmem:[%s468 + $0x4] sm:$0xf]
        %v504 = vld [vmem:[%s468 + $0x8] sm:$0xf]
        %v505 = vld [vmem:[%s468 + $0xc] sm:$0xf]
        %v506 = vld [vmem:[%s468 + $0x10] sm:$0xf]
        %v507 = vld [vmem:[%s468 + $0x14] sm:$0xf]
        %v508 = vld [vmem:[%s468 + $0x18] sm:$0xf]
        %v509 = vld [vmem:[%s468 + $0x1c] sm:$0xf]
        %v510 = vld [vmem:[%s468 + $0x20] sm:$0xf]
        %v511 = vld [vmem:[%s468 + $0x24] sm:$0xf]
        %v512 = vld [vmem:[%s468 + $0x28] sm:$0xf]
        %v513 = vld [vmem:[%s468 + $0x2c] sm:$0xf]
        %v514 = vld [vmem:[%s468 + $0x30] sm:$0xf]
        %v515 = vld [vmem:[%s468 + $0x34] sm:$0xf]
        %v516 = vld [vmem:[%s468 + $0x38] sm:$0xf]
        %v517 = vld [vmem:[%s468 + $0x3c] sm:$0xf]
        %v518 = vld [vmem:[%s488] sm:$0xff]
        %v519 = vld [vmem:[%s488 + $0x8] sm:$0xff]
        %v520 = vld [vmem:[%s488 + $0x10] sm:$0xff]
        %v521 = vld [vmem:[%s488 + $0x18] sm:$0xff]
        %v522 = vld [vmem:[%s488 + $0x20] sm:$0xff]
        %v523 = vld [vmem:[%s488 + $0x28] sm:$0xff]
        %v524 = vld [vmem:[%s488 + $0x30] sm:$0xff]
        %v525 = vld [vmem:[%s488 + $0x38] sm:$0xff]
        %v526 = vld [vmem:[%s488 + $0x40] sm:$0xff]
        %v527 = vld [vmem:[%s488 + $0x48] sm:$0xff]
        %v528 = vld [vmem:[%s488 + $0x50] sm:$0xff]
        %v529 = vld [vmem:[%s488 + $0x58] sm:$0xff]
        %v530 = vld [vmem:[%s488 + $0x60] sm:$0xff]
        %v531 = vld [vmem:[%s488 + $0x68] sm:$0xff]
        %v532 = vld [vmem:[%s488 + $0x70] sm:$0xff]
        %v533 = vld [vmem:[%s488 + $0x78] sm:$0xff]
        %v534 = vadd.f32 %v518, 1.0
        %v535 = vadd.f32 %v519, 1.0
        %v536 = vadd.f32 %v520, 1.0
        %v537 = vadd.f32 %v521, 1.0
        %v538 = vadd.f32 %v522, 1.0
        %v539 = vadd.f32 %v523, 1.0
        %v540 = vadd.f32 %v524, 1.0
        %v541 = vadd.f32 %v525, 1.0
        %v542 = vadd.f32 %v526, 1.0
        %v543 = vadd.f32 %v527, 1.0
        %v544 = vadd.f32 %v528, 1.0
        %v545 = vadd.f32 %v529, 1.0
        %v546 = vadd.f32 %v530, 1.0
        %v547 = vadd.f32 %v531, 1.0
        %v548 = vadd.f32 %v532, 1.0
        %v549 = vadd.f32 %v533, 1.0
        %v550 = vmul.f32 %v534, 0.5
        %v551 = vmul.f32 %v535, 0.5
        %v552 = vmul.f32 %v536, 0.5
        %v553 = vmul.f32 %v537, 0.5
        %v554 = vmul.f32 %v538, 0.5
        %v555 = vmul.f32 %v539, 0.5
        %v556 = vmul.f32 %v540, 0.5
        %v557 = vmul.f32 %v541, 0.5
        %v558 = vmul.f32 %v542, 0.5
        %v559 = vmul.f32 %v543, 0.5
        %v560 = vmul.f32 %v544, 0.5
        %v561 = vmul.f32 %v545, 0.5
        %v562 = vmul.f32 %v546, 0.5
        %v563 = vmul.f32 %v547, 0.5
        %v564 = vmul.f32 %v548, 0.5
        %v565 = vmul.f32 %v549, 0.5
        %v566 = vmul.f32 %v550, 15.0
        %v567 = vmul.f32 %v551, 15.0
        %v568 = vmul.f32 %v552, 15.0
        %v569 = vmul.f32 %v553, 15.0
        %v570 = vmul.f32 %v554, 15.0
        %v571 = vmul.f32 %v555, 15.0
        %v572 = vmul.f32 %v556, 15.0
        %v573 = vmul.f32 %v557, 15.0
        %v574 = vmul.f32 %v558, 15.0
        %v575 = vmul.f32 %v559, 15.0
        %v576 = vmul.f32 %v560, 15.0
        %v577 = vmul.f32 %v561, 15.0
        %v578 = vmul.f32 %v562, 15.0
        %v579 = vmul.f32 %v563, 15.0
        %v580 = vmul.f32 %v564, 15.0
        %v581 = vmul.f32 %v565, 15.0
        %v582 = vmax.f32 %v566, 0.0
        %v583 = vmax.f32 %v567, 0.0
        %v584 = vmax.f32 %v568, 0.0
        %v585 = vmax.f32 %v569, 0.0
        %v586 = vmax.f32 %v570, 0.0
        %v587 = vmax.f32 %v571, 0.0
        %v588 = vmax.f32 %v572, 0.0
        %v589 = vmax.f32 %v573, 0.0
        %v590 = vmax.f32 %v574, 0.0
        %v591 = vmax.f32 %v575, 0.0
        %v592 = vmax.f32 %v576, 0.0
        %v593 = vmax.f32 %v577, 0.0
        %v594 = vmax.f32 %v578, 0.0
        %v595 = vmax.f32 %v579, 0.0
        %v596 = vmax.f32 %v580, 0.0
        %v597 = vmax.f32 %v581, 0.0
        %v598 = vmin.f32 %v582, 15.0
        %v599 = vmin.f32 %v583, 15.0
        %v600 = vmin.f32 %v584, 15.0
        %v601 = vmin.f32 %v585, 15.0
        %v602 = vmin.f32 %v586, 15.0
        %v603 = vmin.f32 %v587, 15.0
        %v604 = vmin.f32 %v588, 15.0
        %v605 = vmin.f32 %v589, 15.0
        %v606 = vmin.f32 %v590, 15.0
        %v607 = vmin.f32 %v591, 15.0
        %v608 = vmin.f32 %v592, 15.0
        %v609 = vmin.f32 %v593, 15.0
        %v610 = vmin.f32 %v594, 15.0
        %v611 = vmin.f32 %v595, 15.0
        %v612 = vmin.f32 %v596, 15.0
        %v613 = vmin.f32 %v597, 15.0
        %v614 = vld [vmem:[%s5] ss:$2 sm:$0x3]
        %s615 = scalar_lea.vmem %s5, 1
        %v616 = vld [vmem:[%s615] ss:$2 sm:$0x3]
        %v618 = vperm.slane %v614, 0
        %v619 = vperm.slane %v614, 1
        %623 = vset.pattern.permute.xlu0 1
        %624 = vperm.xlu0 %623, %v598
        %v625 = vpop.permute.xlu0 %624
        %628 = vset.pattern.permute.xlu0 1
        %629 = vperm.xlu0 %628, %v599
        %v630 = vpop.permute.xlu0 %629
        %633 = vset.pattern.permute.xlu0 1
        %634 = vperm.xlu0 %633, %v600
        %v635 = vpop.permute.xlu0 %634
        %638 = vset.pattern.permute.xlu0 1
        %639 = vperm.xlu0 %638, %v601
        %v640 = vpop.permute.xlu0 %639
        %643 = vset.pattern.permute.xlu0 1
        %644 = vperm.xlu0 %643, %v602
        %v645 = vpop.permute.xlu0 %644
        %648 = vset.pattern.permute.xlu0 1
        %649 = vperm.xlu0 %648, %v603
        %v650 = vpop.permute.xlu0 %649
        %653 = vset.pattern.permute.xlu0 1
        %654 = vperm.xlu0 %653, %v604
        %v655 = vpop.permute.xlu0 %654
        %658 = vset.pattern.permute.xlu0 1
        %659 = vperm.xlu0 %658, %v605
        %v660 = vpop.permute.xlu0 %659
        %663 = vset.pattern.permute.xlu0 1
        %664 = vperm.xlu0 %663, %v606
        %v665 = vpop.permute.xlu0 %664
        %668 = vset.pattern.permute.xlu0 1
        %669 = vperm.xlu0 %668, %v607
        %v670 = vpop.permute.xlu0 %669
        %673 = vset.pattern.permute.xlu0 1
        %674 = vperm.xlu0 %673, %v608
        %v675 = vpop.permute.xlu0 %674
        %678 = vset.pattern.permute.xlu0 1
        %679 = vperm.xlu0 %678, %v609
        %v680 = vpop.permute.xlu0 %679
        %683 = vset.pattern.permute.xlu0 1
        %684 = vperm.xlu0 %683, %v610
        %v685 = vpop.permute.xlu0 %684
        %688 = vset.pattern.permute.xlu0 1
        %689 = vperm.xlu0 %688, %v611
        %v690 = vpop.permute.xlu0 %689
        %693 = vset.pattern.permute.xlu0 1
        %694 = vperm.xlu0 %693, %v612
        %v695 = vpop.permute.xlu0 %694
        %698 = vset.pattern.permute.xlu0 1
        %699 = vperm.xlu0 %698, %v613
        %v700 = vpop.permute.xlu0 %699
        %v702 = vsub.f32 %v618, %v625
        %v703 = vsub.f32 %v619, %v625
        %v704 = vsub.f32 %v618, %v630
        %v705 = vsub.f32 %v619, %v630
        %v706 = vsub.f32 %v618, %v635
        %v707 = vsub.f32 %v619, %v635
        %v708 = vsub.f32 %v618, %v640
        %v709 = vsub.f32 %v619, %v640
        %v710 = vsub.f32 %v618, %v645
        %v711 = vsub.f32 %v619, %v645
        %v712 = vsub.f32 %v618, %v650
        %v713 = vsub.f32 %v619, %v650
        %v714 = vsub.f32 %v618, %v655
        %v715 = vsub.f32 %v619, %v655
        %v716 = vsub.f32 %v618, %v660
        %v717 = vsub.f32 %v619, %v660
        %v718 = vsub.f32 %v618, %v665
        %v719 = vsub.f32 %v619, %v665
        %v720 = vsub.f32 %v618, %v670
        %v721 = vsub.f32 %v619, %v670
        %v722 = vsub.f32 %v618, %v675
        %v723 = vsub.f32 %v619, %v675
        %v724 = vsub.f32 %v618, %v680
        %v725 = vsub.f32 %v619, %v680
        %v726 = vsub.f32 %v618, %v685
        %v727 = vsub.f32 %v619, %v685
        %v728 = vsub.f32 %v618, %v690
        %v729 = vsub.f32 %v619, %v690
        %v730 = vsub.f32 %v618, %v695
        %v731 = vsub.f32 %v619, %v695
        %v732 = vsub.f32 %v618, %v700
        %v733 = vsub.f32 %v619, %v700
        %v734 = vand.u32 2147483647, %v702
        %v735 = vand.u32 2147483647, %v703
        %v736 = vand.u32 2147483647, %v704
        %v737 = vand.u32 2147483647, %v705
        %v738 = vand.u32 2147483647, %v706
        %v739 = vand.u32 2147483647, %v707
        %v740 = vand.u32 2147483647, %v708
        %v741 = vand.u32 2147483647, %v709
        %v742 = vand.u32 2147483647, %v710
        %v743 = vand.u32 2147483647, %v711
        %v744 = vand.u32 2147483647, %v712
        %v745 = vand.u32 2147483647, %v713
        %v746 = vand.u32 2147483647, %v714
        %v747 = vand.u32 2147483647, %v715
        %v748 = vand.u32 2147483647, %v716
        %v749 = vand.u32 2147483647, %v717
        %v750 = vand.u32 2147483647, %v718
        %v751 = vand.u32 2147483647, %v719
        %v752 = vand.u32 2147483647, %v720
        %v753 = vand.u32 2147483647, %v721
        %v754 = vand.u32 2147483647, %v722
        %v755 = vand.u32 2147483647, %v723
        %v756 = vand.u32 2147483647, %v724
        %v757 = vand.u32 2147483647, %v725
        %v758 = vand.u32 2147483647, %v726
        %v759 = vand.u32 2147483647, %v727
        %v760 = vand.u32 2147483647, %v728
        %v761 = vand.u32 2147483647, %v729
        %v762 = vand.u32 2147483647, %v730
        %v763 = vand.u32 2147483647, %v731
        %v764 = vand.u32 2147483647, %v732
        %v765 = vand.u32 2147483647, %v733
        %v766 = vsub.f32 1.0, %v734
        %v767 = vsub.f32 1.0, %v735
        %v768 = vsub.f32 1.0, %v736
        %v769 = vsub.f32 1.0, %v737
        %v770 = vsub.f32 1.0, %v738
        %v771 = vsub.f32 1.0, %v739
        %v772 = vsub.f32 1.0, %v740
        %v773 = vsub.f32 1.0, %v741
        %v774 = vsub.f32 1.0, %v742
        %v775 = vsub.f32 1.0, %v743
        %v776 = vsub.f32 1.0, %v744
        %v777 = vsub.f32 1.0, %v745
        %v778 = vsub.f32 1.0, %v746
        %v779 = vsub.f32 1.0, %v747
        %v780 = vsub.f32 1.0, %v748
        %v781 = vsub.f32 1.0, %v749
        %v782 = vsub.f32 1.0, %v750
        %v783 = vsub.f32 1.0, %v751
        %v784 = vsub.f32 1.0, %v752
        %v785 = vsub.f32 1.0, %v753
        %v786 = vsub.f32 1.0, %v754
        %v787 = vsub.f32 1.0, %v755
        %v788 = vsub.f32 1.0, %v756
        %v789 = vsub.f32 1.0, %v757
        %v790 = vsub.f32 1.0, %v758
        %v791 = vsub.f32 1.0, %v759
        %v792 = vsub.f32 1.0, %v760
        %v793 = vsub.f32 1.0, %v761
        %v794 = vsub.f32 1.0, %v762
        %v795 = vsub.f32 1.0, %v763
        %v796 = vsub.f32 1.0, %v764
        %v797 = vsub.f32 1.0, %v765
        %v798 = vmax.f32 %v766, 0.0
        %v799 = vmax.f32 %v767, 0.0
        %v800 = vmax.f32 %v768, 0.0
        %v801 = vmax.f32 %v769, 0.0
        %v802 = vmax.f32 %v770, 0.0
        %v803 = vmax.f32 %v771, 0.0
        %v804 = vmax.f32 %v772, 0.0
        %v805 = vmax.f32 %v773, 0.0
        %v806 = vmax.f32 %v774, 0.0
        %v807 = vmax.f32 %v775, 0.0
        %v808 = vmax.f32 %v776, 0.0
        %v809 = vmax.f32 %v777, 0.0
        %v810 = vmax.f32 %v778, 0.0
        %v811 = vmax.f32 %v779, 0.0
        %v812 = vmax.f32 %v780, 0.0
        %v813 = vmax.f32 %v781, 0.0
        %v814 = vmax.f32 %v782, 0.0
        %v815 = vmax.f32 %v783, 0.0
        %v816 = vmax.f32 %v784, 0.0
        %v817 = vmax.f32 %v785, 0.0
        %v818 = vmax.f32 %v786, 0.0
        %v819 = vmax.f32 %v787, 0.0
        %v820 = vmax.f32 %v788, 0.0
        %v821 = vmax.f32 %v789, 0.0
        %v822 = vmax.f32 %v790, 0.0
        %v823 = vmax.f32 %v791, 0.0
        %v824 = vmax.f32 %v792, 0.0
        %v825 = vmax.f32 %v793, 0.0
        %v826 = vmax.f32 %v794, 0.0
        %v827 = vmax.f32 %v795, 0.0
        %v828 = vmax.f32 %v796, 0.0
        %v829 = vmax.f32 %v797, 0.0
        %v831 = vperm.slane %v616, 0
        %v832 = vperm.slane %v616, 1
        %835 = vset.pattern.permute.xlu0 0
        %836 = vperm.xlu0 %835, %v598
        %v837 = vpop.permute.xlu0 %836
        %839 = vset.pattern.permute.xlu0 0
        %840 = vperm.xlu0 %839, %v599
        %v841 = vpop.permute.xlu0 %840
        %843 = vset.pattern.permute.xlu0 0
        %844 = vperm.xlu0 %843, %v600
        %v845 = vpop.permute.xlu0 %844
        %847 = vset.pattern.permute.xlu0 0
        %848 = vperm.xlu0 %847, %v601
        %v849 = vpop.permute.xlu0 %848
        %851 = vset.pattern.permute.xlu0 0
        %852 = vperm.xlu0 %851, %v602
        %v853 = vpop.permute.xlu0 %852
        %855 = vset.pattern.permute.xlu0 0
        %856 = vperm.xlu0 %855, %v603
        %v857 = vpop.permute.xlu0 %856
        %859 = vset.pattern.permute.xlu0 0
        %860 = vperm.xlu0 %859, %v604
        %v861 = vpop.permute.xlu0 %860
        %863 = vset.pattern.permute.xlu0 0
        %864 = vperm.xlu0 %863, %v605
        %v865 = vpop.permute.xlu0 %864
        %867 = vset.pattern.permute.xlu0 0
        %868 = vperm.xlu0 %867, %v606
        %v869 = vpop.permute.xlu0 %868
        %871 = vset.pattern.permute.xlu0 0
        %872 = vperm.xlu0 %871, %v607
        %v873 = vpop.permute.xlu0 %872
        %875 = vset.pattern.permute.xlu0 0
        %876 = vperm.xlu0 %875, %v608
        %v877 = vpop.permute.xlu0 %876
        %879 = vset.pattern.permute.xlu0 0
        %880 = vperm.xlu0 %879, %v609
        %v881 = vpop.permute.xlu0 %880
        %883 = vset.pattern.permute.xlu0 0
        %884 = vperm.xlu0 %883, %v610
        %v885 = vpop.permute.xlu0 %884
        %887 = vset.pattern.permute.xlu0 0
        %888 = vperm.xlu0 %887, %v611
        %v889 = vpop.permute.xlu0 %888
        %891 = vset.pattern.permute.xlu0 0
        %892 = vperm.xlu0 %891, %v612
        %v893 = vpop.permute.xlu0 %892
        %895 = vset.pattern.permute.xlu0 0
        %896 = vperm.xlu0 %895, %v613
        %v897 = vpop.permute.xlu0 %896
        %v899 = vsub.f32 %v831, %v837
        %v900 = vsub.f32 %v832, %v837
        %v901 = vsub.f32 %v831, %v841
        %v902 = vsub.f32 %v832, %v841
        %v903 = vsub.f32 %v831, %v845
        %v904 = vsub.f32 %v832, %v845
        %v905 = vsub.f32 %v831, %v849
        %v906 = vsub.f32 %v832, %v849
        %v907 = vsub.f32 %v831, %v853
        %v908 = vsub.f32 %v832, %v853
        %v909 = vsub.f32 %v831, %v857
        %v910 = vsub.f32 %v832, %v857
        %v911 = vsub.f32 %v831, %v861
        %v912 = vsub.f32 %v832, %v861
        %v913 = vsub.f32 %v831, %v865
        %v914 = vsub.f32 %v832, %v865
        %v915 = vsub.f32 %v831, %v869
        %v916 = vsub.f32 %v832, %v869
        %v917 = vsub.f32 %v831, %v873
        %v918 = vsub.f32 %v832, %v873
        %v919 = vsub.f32 %v831, %v877
        %v920 = vsub.f32 %v832, %v877
        %v921 = vsub.f32 %v831, %v881
        %v922 = vsub.f32 %v832, %v881
        %v923 = vsub.f32 %v831, %v885
        %v924 = vsub.f32 %v832, %v885
        %v925 = vsub.f32 %v831, %v889
        %v926 = vsub.f32 %v832, %v889
        %v927 = vsub.f32 %v831, %v893
        %v928 = vsub.f32 %v832, %v893
        %v929 = vsub.f32 %v831, %v897
        %v930 = vsub.f32 %v832, %v897
        %v931 = vand.u32 2147483647, %v899
        %v932 = vand.u32 2147483647, %v900
        %v933 = vand.u32 2147483647, %v901
        %v934 = vand.u32 2147483647, %v902
        %v935 = vand.u32 2147483647, %v903
        %v936 = vand.u32 2147483647, %v904
        %v937 = vand.u32 2147483647, %v905
        %v938 = vand.u32 2147483647, %v906
        %v939 = vand.u32 2147483647, %v907
        %v940 = vand.u32 2147483647, %v908
        %v941 = vand.u32 2147483647, %v909
        %v942 = vand.u32 2147483647, %v910
        %v943 = vand.u32 2147483647, %v911
        %v944 = vand.u32 2147483647, %v912
        %v945 = vand.u32 2147483647, %v913
        %v946 = vand.u32 2147483647, %v914
        %v947 = vand.u32 2147483647, %v915
        %v948 = vand.u32 2147483647, %v916
        %v949 = vand.u32 2147483647, %v917
        %v950 = vand.u32 2147483647, %v918
        %v951 = vand.u32 2147483647, %v919
        %v952 = vand.u32 2147483647, %v920
        %v953 = vand.u32 2147483647, %v921
        %v954 = vand.u32 2147483647, %v922
        %v955 = vand.u32 2147483647, %v923
        %v956 = vand.u32 2147483647, %v924
        %v957 = vand.u32 2147483647, %v925
        %v958 = vand.u32 2147483647, %v926
        %v959 = vand.u32 2147483647, %v927
        %v960 = vand.u32 2147483647, %v928
        %v961 = vand.u32 2147483647, %v929
        %v962 = vand.u32 2147483647, %v930
        %v963 = vsub.f32 1.0, %v931
        %v964 = vsub.f32 1.0, %v932
        %v965 = vsub.f32 1.0, %v933
        %v966 = vsub.f32 1.0, %v934
        %v967 = vsub.f32 1.0, %v935
        %v968 = vsub.f32 1.0, %v936
        %v969 = vsub.f32 1.0, %v937
        %v970 = vsub.f32 1.0, %v938
        %v971 = vsub.f32 1.0, %v939
        %v972 = vsub.f32 1.0, %v940
        %v973 = vsub.f32 1.0, %v941
        %v974 = vsub.f32 1.0, %v942
        %v975 = vsub.f32 1.0, %v943
        %v976 = vsub.f32 1.0, %v944
        %v977 = vsub.f32 1.0, %v945
        %v978 = vsub.f32 1.0, %v946
        %v979 = vsub.f32 1.0, %v947
        %v980 = vsub.f32 1.0, %v948
        %v981 = vsub.f32 1.0, %v949
        %v982 = vsub.f32 1.0, %v950
        %v983 = vsub.f32 1.0, %v951
        %v984 = vsub.f32 1.0, %v952
        %v985 = vsub.f32 1.0, %v953
        %v986 = vsub.f32 1.0, %v954
        %v987 = vsub.f32 1.0, %v955
        %v988 = vsub.f32 1.0, %v956
        %v989 = vsub.f32 1.0, %v957
        %v990 = vsub.f32 1.0, %v958
        %v991 = vsub.f32 1.0, %v959
        %v992 = vsub.f32 1.0, %v960
        %v993 = vsub.f32 1.0, %v961
        %v994 = vsub.f32 1.0, %v962
        %v995 = vmax.f32 %v963, 0.0
        %v996 = vmax.f32 %v964, 0.0
        %v997 = vmax.f32 %v965, 0.0
        %v998 = vmax.f32 %v966, 0.0
        %v999 = vmax.f32 %v967, 0.0
        %v1000 = vmax.f32 %v968, 0.0
        %v1001 = vmax.f32 %v969, 0.0
        %v1002 = vmax.f32 %v970, 0.0
        %v1003 = vmax.f32 %v971, 0.0
        %v1004 = vmax.f32 %v972, 0.0
        %v1005 = vmax.f32 %v973, 0.0
        %v1006 = vmax.f32 %v974, 0.0
        %v1007 = vmax.f32 %v975, 0.0
        %v1008 = vmax.f32 %v976, 0.0
        %v1009 = vmax.f32 %v977, 0.0
        %v1010 = vmax.f32 %v978, 0.0
        %v1011 = vmax.f32 %v979, 0.0
        %v1012 = vmax.f32 %v980, 0.0
        %v1013 = vmax.f32 %v981, 0.0
        %v1014 = vmax.f32 %v982, 0.0
        %v1015 = vmax.f32 %v983, 0.0
        %v1016 = vmax.f32 %v984, 0.0
        %v1017 = vmax.f32 %v985, 0.0
        %v1018 = vmax.f32 %v986, 0.0
        %v1019 = vmax.f32 %v987, 0.0
        %v1020 = vmax.f32 %v988, 0.0
        %v1021 = vmax.f32 %v989, 0.0
        %v1022 = vmax.f32 %v990, 0.0
        %v1023 = vmax.f32 %v991, 0.0
        %v1024 = vmax.f32 %v992, 0.0
        %v1025 = vmax.f32 %v993, 0.0
        %v1026 = vmax.f32 %v994, 0.0
        %v1027 = vmul.f32 %v798, %v995
        %v1028 = vmul.f32 %v799, %v996
        %v1029 = vmul.f32 %v800, %v997
        %v1030 = vmul.f32 %v801, %v998
        %v1031 = vmul.f32 %v802, %v999
        %v1032 = vmul.f32 %v803, %v1000
        %v1033 = vmul.f32 %v804, %v1001
        %v1034 = vmul.f32 %v805, %v1002
        %v1035 = vmul.f32 %v806, %v1003
        %v1036 = vmul.f32 %v807, %v1004
        %v1037 = vmul.f32 %v808, %v1005
        %v1038 = vmul.f32 %v809, %v1006
        %v1039 = vmul.f32 %v810, %v1007
        %v1040 = vmul.f32 %v811, %v1008
        %v1041 = vmul.f32 %v812, %v1009
        %v1042 = vmul.f32 %v813, %v1010
        %v1043 = vmul.f32 %v814, %v1011
        %v1044 = vmul.f32 %v815, %v1012
        %v1045 = vmul.f32 %v816, %v1013
        %v1046 = vmul.f32 %v817, %v1014
        %v1047 = vmul.f32 %v818, %v1015
        %v1048 = vmul.f32 %v819, %v1016
        %v1049 = vmul.f32 %v820, %v1017
        %v1050 = vmul.f32 %v821, %v1018
        %v1051 = vmul.f32 %v822, %v1019
        %v1052 = vmul.f32 %v823, %v1020
        %v1053 = vmul.f32 %v824, %v1021
        %v1054 = vmul.f32 %v825, %v1022
        %v1055 = vmul.f32 %v826, %v1023
        %v1056 = vmul.f32 %v827, %v1024
        %v1057 = vmul.f32 %v828, %v1025
        %v1058 = vmul.f32 %v829, %v1026
        %v1059 = vpack.c.bf16 %v1029, %v1027
        %v1060 = vpack.c.bf16 %v1030, %v1028
        %v1061 = vpack.c.bf16 %v1033, %v1031
        %v1062 = vpack.c.bf16 %v1034, %v1032
        %v1063 = vpack.c.bf16 %v1037, %v1035
        %v1064 = vpack.c.bf16 %v1038, %v1036
        %v1065 = vpack.c.bf16 %v1041, %v1039
        %v1066 = vpack.c.bf16 %v1042, %v1040
        %v1067 = vpack.c.bf16 %v1045, %v1043
        %v1068 = vpack.c.bf16 %v1046, %v1044
        %v1069 = vpack.c.bf16 %v1049, %v1047
        %v1070 = vpack.c.bf16 %v1050, %v1048
        %v1071 = vpack.c.bf16 %v1053, %v1051
        %v1072 = vpack.c.bf16 %v1054, %v1052
        %v1073 = vpack.c.bf16 %v1057, %v1055
        %v1074 = vpack.c.bf16 %v1058, %v1056
        %v1075 = vld [vmem:[%s474] sm:$0xf]
        %v1076 = vld [vmem:[%s474 + $0x4] sm:$0xf]
        %v1077 = vld [vmem:[%s474 + $0x8] sm:$0xf]
        %v1078 = vld [vmem:[%s474 + $0xc] sm:$0xf]
        %v1079 = vld [vmem:[%s474 + $0x10] sm:$0xf]
        %v1080 = vld [vmem:[%s474 + $0x14] sm:$0xf]
        %v1081 = vld [vmem:[%s474 + $0x18] sm:$0xf]
        %v1082 = vld [vmem:[%s474 + $0x1c] sm:$0xf]
        %v1083 = vld [vmem:[%s474 + $0x20] sm:$0xf]
        %v1084 = vld [vmem:[%s474 + $0x24] sm:$0xf]
        %v1085 = vld [vmem:[%s474 + $0x28] sm:$0xf]
        %v1086 = vld [vmem:[%s474 + $0x2c] sm:$0xf]
        %v1087 = vld [vmem:[%s474 + $0x30] sm:$0xf]
        %v1088 = vld [vmem:[%s474 + $0x34] sm:$0xf]
        %v1089 = vld [vmem:[%s474 + $0x38] sm:$0xf]
        %v1090 = vld [vmem:[%s474 + $0x3c] sm:$0xf]
        %v1091 = vld [vmem:[%s474 + $0x40] sm:$0xf]
        %v1092 = vld [vmem:[%s474 + $0x44] sm:$0xf]
        %v1093 = vld [vmem:[%s474 + $0x48] sm:$0xf]
        %v1094 = vld [vmem:[%s474 + $0x4c] sm:$0xf]
        %v1095 = vld [vmem:[%s474 + $0x50] sm:$0xf]
        %v1096 = vld [vmem:[%s474 + $0x54] sm:$0xf]
        %v1097 = vld [vmem:[%s474 + $0x58] sm:$0xf]
        %v1098 = vld [vmem:[%s474 + $0x5c] sm:$0xf]
        %v1099 = vld [vmem:[%s474 + $0x60] sm:$0xf]
        %v1100 = vld [vmem:[%s474 + $0x64] sm:$0xf]
        %v1101 = vld [vmem:[%s474 + $0x68] sm:$0xf]
        %v1102 = vld [vmem:[%s474 + $0x6c] sm:$0xf]
        %v1103 = vld [vmem:[%s474 + $0x70] sm:$0xf]
        %v1104 = vld [vmem:[%s474 + $0x74] sm:$0xf]
        %v1105 = vld [vmem:[%s474 + $0x78] sm:$0xf]
        %v1106 = vld [vmem:[%s474 + $0x7c] sm:$0xf]
        %v1139 = vunpack.c.l.b16 %v1075
        %v1140 = vunpack.c.l.b16 %v1076
        %v1141 = vunpack.c.l.b16 %v1077
        %v1142 = vunpack.c.l.b16 %v1078
        %v1143 = vunpack.c.l.b16 %v1079
        %v1144 = vunpack.c.l.b16 %v1080
        %v1145 = vunpack.c.l.b16 %v1081
        %v1146 = vunpack.c.l.b16 %v1082
        %v1147 = vunpack.c.l.b16 %v1083
        %v1148 = vunpack.c.l.b16 %v1084
        %v1149 = vunpack.c.l.b16 %v1085
        %v1150 = vunpack.c.l.b16 %v1086
        %v1151 = vunpack.c.l.b16 %v1087
        %v1152 = vunpack.c.l.b16 %v1088
        %v1153 = vunpack.c.l.b16 %v1089
        %v1154 = vunpack.c.l.b16 %v1090
        %v1155 = vunpack.c.l.b16 %v1091
        %v1156 = vunpack.c.l.b16 %v1092
        %v1157 = vunpack.c.l.b16 %v1093
        %v1158 = vunpack.c.l.b16 %v1094
        %v1159 = vunpack.c.l.b16 %v1095
        %v1160 = vunpack.c.l.b16 %v1096
        %v1161 = vunpack.c.l.b16 %v1097
        %v1162 = vunpack.c.l.b16 %v1098
        %v1163 = vunpack.c.l.b16 %v1099
        %v1164 = vunpack.c.l.b16 %v1100
        %v1165 = vunpack.c.l.b16 %v1101
        %v1166 = vunpack.c.l.b16 %v1102
        %v1167 = vunpack.c.l.b16 %v1103
        %v1168 = vunpack.c.l.b16 %v1104
        %v1169 = vunpack.c.l.b16 %v1105
        %v1170 = vunpack.c.l.b16 %v1106
        %v1171 = vpack.c.b16 %v1140, %v1139
        %v1172 = vpack.c.b16 %v1142, %v1141
        %v1173 = vpack.c.b16 %v1144, %v1143
        %v1174 = vpack.c.b16 %v1146, %v1145
        %v1175 = vpack.c.b16 %v1148, %v1147
        %v1176 = vpack.c.b16 %v1150, %v1149
        %v1177 = vpack.c.b16 %v1152, %v1151
        %v1178 = vpack.c.b16 %v1154, %v1153
        %v1179 = vpack.c.b16 %v1156, %v1155
        %v1180 = vpack.c.b16 %v1158, %v1157
        %v1181 = vpack.c.b16 %v1160, %v1159
        %v1182 = vpack.c.b16 %v1162, %v1161
        %v1183 = vpack.c.b16 %v1164, %v1163
        %v1184 = vpack.c.b16 %v1166, %v1165
        %v1185 = vpack.c.b16 %v1168, %v1167
        %v1186 = vpack.c.b16 %v1170, %v1169
        %1203 = vmatpush.bf16.msra.mxu0 %v1178
        %1204 = vmatpush.bf16.msra.mxu0 %v1177
        %1205 = vmatpush.bf16.msra.mxu0 %v1176
        %1206 = vmatpush.bf16.msra.mxu0 %v1175
        %1207 = vmatpush.bf16.msra.mxu0 %v1174
        %1208 = vmatpush.bf16.msra.mxu0 %v1173
        %1209 = vmatpush.bf16.msra.mxu0 %v1172
        %1210 = vmatpush.bf16.msra.mxu0 %v1171
        %1211 = vmatmul.bf16.gmra.mxu0 %v1059
        %v1212 = vpop.f32.mrf.mxu0
        %v1213 = vadd.f32 0.0, %v1212
        %v1214 = vpop.f32.mrf.mxu0
        %v1215 = vadd.f32 0.0, %v1214
        %1216 = vmatmul.bf16.gmra.mxu0 %v1061
        %v1217 = vpop.f32.mrf.mxu0
        %v1218 = vadd.f32 0.0, %v1217
        %v1219 = vpop.f32.mrf.mxu0
        %v1220 = vadd.f32 0.0, %v1219
        %1221 = vmatmul.bf16.gmra.mxu0 %v1063
        %v1222 = vpop.f32.mrf.mxu0
        %v1223 = vadd.f32 0.0, %v1222
        %v1224 = vpop.f32.mrf.mxu0
        %v1225 = vadd.f32 0.0, %v1224
        %1226 = vmatmul.bf16.gmra.mxu0 %v1065
        %v1227 = vpop.f32.mrf.mxu0
        %v1228 = vadd.f32 0.0, %v1227
        %v1229 = vpop.f32.mrf.mxu0
        %v1230 = vadd.f32 0.0, %v1229
        %1231 = vmatmul.bf16.gmra.mxu0 %v1067
        %v1232 = vpop.f32.mrf.mxu0
        %v1233 = vadd.f32 0.0, %v1232
        %v1234 = vpop.f32.mrf.mxu0
        %v1235 = vadd.f32 0.0, %v1234
        %1236 = vmatmul.bf16.gmra.mxu0 %v1069
        %v1237 = vpop.f32.mrf.mxu0
        %v1238 = vadd.f32 0.0, %v1237
        %v1239 = vpop.f32.mrf.mxu0
        %v1240 = vadd.f32 0.0, %v1239
        %1241 = vmatmul.bf16.gmra.mxu0 %v1071
        %v1242 = vpop.f32.mrf.mxu0
        %v1243 = vadd.f32 0.0, %v1242
        %v1244 = vpop.f32.mrf.mxu0
        %v1245 = vadd.f32 0.0, %v1244
        %1246 = vmatmul.bf16.gmra.mxu0 %v1073
        %v1247 = vpop.f32.mrf.mxu0
        %v1248 = vadd.f32 0.0, %v1247
        %v1249 = vpop.f32.mrf.mxu0
        %v1250 = vadd.f32 0.0, %v1249
        %1251 = vdwg.mxu0
        %1252 = vmatpush.bf16.msra.mxu0 %v1186
        %1253 = vmatpush.bf16.msra.mxu0 %v1185
        %1254 = vmatpush.bf16.msra.mxu0 %v1184
        %1255 = vmatpush.bf16.msra.mxu0 %v1183
        %1256 = vmatpush.bf16.msra.mxu0 %v1182
        %1257 = vmatpush.bf16.msra.mxu0 %v1181
        %1258 = vmatpush.bf16.msra.mxu0 %v1180
        %1259 = vmatpush.bf16.msra.mxu0 %v1179
        %1260 = vmatmul.bf16.gmra.mxu0 %v1060
        %v1261 = vpop.f32.mrf.mxu0
        %v1262 = vadd.f32 %v1213, %v1261
        %v1263 = vpop.f32.mrf.mxu0
        %v1264 = vadd.f32 %v1215, %v1263
        %1265 = vmatmul.bf16.gmra.mxu0 %v1062
        %v1266 = vpop.f32.mrf.mxu0
        %v1267 = vadd.f32 %v1218, %v1266
        %v1268 = vpop.f32.mrf.mxu0
        %v1269 = vadd.f32 %v1220, %v1268
        %1270 = vmatmul.bf16.gmra.mxu0 %v1064
        %v1271 = vpop.f32.mrf.mxu0
        %v1272 = vadd.f32 %v1223, %v1271
        %v1273 = vpop.f32.mrf.mxu0
        %v1274 = vadd.f32 %v1225, %v1273
        %1275 = vmatmul.bf16.gmra.mxu0 %v1066
        %v1276 = vpop.f32.mrf.mxu0
        %v1277 = vadd.f32 %v1228, %v1276
        %v1278 = vpop.f32.mrf.mxu0
        %v1279 = vadd.f32 %v1230, %v1278
        %1280 = vmatmul.bf16.gmra.mxu0 %v1068
        %v1281 = vpop.f32.mrf.mxu0
        %v1282 = vadd.f32 %v1233, %v1281
        %v1283 = vpop.f32.mrf.mxu0
        %v1284 = vadd.f32 %v1235, %v1283
        %1285 = vmatmul.bf16.gmra.mxu0 %v1070
        %v1286 = vpop.f32.mrf.mxu0
        %v1287 = vadd.f32 %v1238, %v1286
        %v1288 = vpop.f32.mrf.mxu0
        %v1289 = vadd.f32 %v1240, %v1288
        %1290 = vmatmul.bf16.gmra.mxu0 %v1072
        %v1291 = vpop.f32.mrf.mxu0
        %v1292 = vadd.f32 %v1243, %v1291
        %v1293 = vpop.f32.mrf.mxu0
        %v1294 = vadd.f32 %v1245, %v1293
        %1295 = vmatmul.bf16.gmra.mxu0 %v1074
        %v1296 = vpop.f32.mrf.mxu0
        %v1297 = vadd.f32 %v1248, %v1296
        %v1298 = vpop.f32.mrf.mxu0
        %v1299 = vadd.f32 %v1250, %v1298
        %1300 = vdwg.mxu0
        %v1301 = vld [vmem:[%s498] sm:$0xff]
        %v1302 = vld [vmem:[%s498 + $0x8] sm:$0xff]
        %v1303 = vld [vmem:[%s498 + $0x10] sm:$0xff]
        %v1304 = vld [vmem:[%s498 + $0x18] sm:$0xff]
        %v1305 = vld [vmem:[%s498 + $0x20] sm:$0xff]
        %v1306 = vld [vmem:[%s498 + $0x28] sm:$0xff]
        %v1307 = vld [vmem:[%s498 + $0x30] sm:$0xff]
        %v1308 = vld [vmem:[%s498 + $0x38] sm:$0xff]
        %v1309 = vld [vmem:[%s498 + $0x40] sm:$0xff]
        %v1310 = vld [vmem:[%s498 + $0x48] sm:$0xff]
        %v1311 = vld [vmem:[%s498 + $0x50] sm:$0xff]
        %v1312 = vld [vmem:[%s498 + $0x58] sm:$0xff]
        %v1313 = vld [vmem:[%s498 + $0x60] sm:$0xff]
        %v1314 = vld [vmem:[%s498 + $0x68] sm:$0xff]
        %v1315 = vld [vmem:[%s498 + $0x70] sm:$0xff]
        %v1316 = vld [vmem:[%s498 + $0x78] sm:$0xff]
        %v1317 = vadd.f32 %v1301, 1.0
        %v1318 = vadd.f32 %v1302, 1.0
        %v1319 = vadd.f32 %v1303, 1.0
        %v1320 = vadd.f32 %v1304, 1.0
        %v1321 = vadd.f32 %v1305, 1.0
        %v1322 = vadd.f32 %v1306, 1.0
        %v1323 = vadd.f32 %v1307, 1.0
        %v1324 = vadd.f32 %v1308, 1.0
        %v1325 = vadd.f32 %v1309, 1.0
        %v1326 = vadd.f32 %v1310, 1.0
        %v1327 = vadd.f32 %v1311, 1.0
        %v1328 = vadd.f32 %v1312, 1.0
        %v1329 = vadd.f32 %v1313, 1.0
        %v1330 = vadd.f32 %v1314, 1.0
        %v1331 = vadd.f32 %v1315, 1.0
        %v1332 = vadd.f32 %v1316, 1.0
        %v1333 = vmul.f32 %v1317, 0.5
        %v1334 = vmul.f32 %v1318, 0.5
        %v1335 = vmul.f32 %v1319, 0.5
        %v1336 = vmul.f32 %v1320, 0.5
        %v1337 = vmul.f32 %v1321, 0.5
        %v1338 = vmul.f32 %v1322, 0.5
        %v1339 = vmul.f32 %v1323, 0.5
        %v1340 = vmul.f32 %v1324, 0.5
        %v1341 = vmul.f32 %v1325, 0.5
        %v1342 = vmul.f32 %v1326, 0.5
        %v1343 = vmul.f32 %v1327, 0.5
        %v1344 = vmul.f32 %v1328, 0.5
        %v1345 = vmul.f32 %v1329, 0.5
        %v1346 = vmul.f32 %v1330, 0.5
        %v1347 = vmul.f32 %v1331, 0.5
        %v1348 = vmul.f32 %v1332, 0.5
        %v1349 = vmul.f32 %v1333, 31.0
        %v1350 = vmul.f32 %v1334, 31.0
        %v1351 = vmul.f32 %v1335, 31.0
        %v1352 = vmul.f32 %v1336, 31.0
        %v1353 = vmul.f32 %v1337, 31.0
        %v1354 = vmul.f32 %v1338, 31.0
        %v1355 = vmul.f32 %v1339, 31.0
        %v1356 = vmul.f32 %v1340, 31.0
        %v1357 = vmul.f32 %v1341, 31.0
        %v1358 = vmul.f32 %v1342, 31.0
        %v1359 = vmul.f32 %v1343, 31.0
        %v1360 = vmul.f32 %v1344, 31.0
        %v1361 = vmul.f32 %v1345, 31.0
        %v1362 = vmul.f32 %v1346, 31.0
        %v1363 = vmul.f32 %v1347, 31.0
        %v1364 = vmul.f32 %v1348, 31.0
        %v1365 = vmax.f32 %v1349, 0.0
        %v1366 = vmax.f32 %v1350, 0.0
        %v1367 = vmax.f32 %v1351, 0.0
        %v1368 = vmax.f32 %v1352, 0.0
        %v1369 = vmax.f32 %v1353, 0.0
        %v1370 = vmax.f32 %v1354, 0.0
        %v1371 = vmax.f32 %v1355, 0.0
        %v1372 = vmax.f32 %v1356, 0.0
        %v1373 = vmax.f32 %v1357, 0.0
        %v1374 = vmax.f32 %v1358, 0.0
        %v1375 = vmax.f32 %v1359, 0.0
        %v1376 = vmax.f32 %v1360, 0.0
        %v1377 = vmax.f32 %v1361, 0.0
        %v1378 = vmax.f32 %v1362, 0.0
        %v1379 = vmax.f32 %v1363, 0.0
        %v1380 = vmax.f32 %v1364, 0.0
        %v1381 = vmin.f32 %v1365, 31.0
        %v1382 = vmin.f32 %v1366, 31.0
        %v1383 = vmin.f32 %v1367, 31.0
        %v1384 = vmin.f32 %v1368, 31.0
        %v1385 = vmin.f32 %v1369, 31.0
        %v1386 = vmin.f32 %v1370, 31.0
        %v1387 = vmin.f32 %v1371, 31.0
        %v1388 = vmin.f32 %v1372, 31.0
        %v1389 = vmin.f32 %v1373, 31.0
        %v1390 = vmin.f32 %v1374, 31.0
        %v1391 = vmin.f32 %v1375, 31.0
        %v1392 = vmin.f32 %v1376, 31.0
        %v1393 = vmin.f32 %v1377, 31.0
        %v1394 = vmin.f32 %v1378, 31.0
        %v1395 = vmin.f32 %v1379, 31.0
        %v1396 = vmin.f32 %v1380, 31.0
        %v1397 = vmul.f32 %v1333, 7.0
        %v1398 = vmul.f32 %v1334, 7.0
        %v1399 = vmul.f32 %v1335, 7.0
        %v1400 = vmul.f32 %v1336, 7.0
        %v1401 = vmul.f32 %v1337, 7.0
        %v1402 = vmul.f32 %v1338, 7.0
        %v1403 = vmul.f32 %v1339, 7.0
        %v1404 = vmul.f32 %v1340, 7.0
        %v1405 = vmul.f32 %v1341, 7.0
        %v1406 = vmul.f32 %v1342, 7.0
        %v1407 = vmul.f32 %v1343, 7.0
        %v1408 = vmul.f32 %v1344, 7.0
        %v1409 = vmul.f32 %v1345, 7.0
        %v1410 = vmul.f32 %v1346, 7.0
        %v1411 = vmul.f32 %v1347, 7.0
        %v1412 = vmul.f32 %v1348, 7.0
        %v1413 = vmax.f32 %v1397, 0.0
        %v1414 = vmax.f32 %v1398, 0.0
        %v1415 = vmax.f32 %v1399, 0.0
        %v1416 = vmax.f32 %v1400, 0.0
        %v1417 = vmax.f32 %v1401, 0.0
        %v1418 = vmax.f32 %v1402, 0.0
        %v1419 = vmax.f32 %v1403, 0.0
        %v1420 = vmax.f32 %v1404, 0.0
        %v1421 = vmax.f32 %v1405, 0.0
        %v1422 = vmax.f32 %v1406, 0.0
        %v1423 = vmax.f32 %v1407, 0.0
        %v1424 = vmax.f32 %v1408, 0.0
        %v1425 = vmax.f32 %v1409, 0.0
        %v1426 = vmax.f32 %v1410, 0.0
        %v1427 = vmax.f32 %v1411, 0.0
        %v1428 = vmax.f32 %v1412, 0.0
        %v1429 = vmin.f32 %v1413, 7.0
        %v1430 = vmin.f32 %v1414, 7.0
        %v1431 = vmin.f32 %v1415, 7.0
        %v1432 = vmin.f32 %v1416, 7.0
        %v1433 = vmin.f32 %v1417, 7.0
        %v1434 = vmin.f32 %v1418, 7.0
        %v1435 = vmin.f32 %v1419, 7.0
        %v1436 = vmin.f32 %v1420, 7.0
        %v1437 = vmin.f32 %v1421, 7.0
        %v1438 = vmin.f32 %v1422, 7.0
        %v1439 = vmin.f32 %v1423, 7.0
        %v1440 = vmin.f32 %v1424, 7.0
        %v1441 = vmin.f32 %v1425, 7.0
        %v1442 = vmin.f32 %v1426, 7.0
        %v1443 = vmin.f32 %v1427, 7.0
        %v1444 = vmin.f32 %v1428, 7.0
        %v1445 = vld [vmem:[%s6] ss:$2 sm:$0x3]
        %s1446 = scalar_lea.vmem %s6, 1
        %v1447 = vld [vmem:[%s1446] ss:$2 sm:$0x3]
        %v1449 = vperm.slane %v1445, 0
        %v1450 = vperm.slane %v1445, 1
        %1454 = vset.pattern.permute.xlu0 1
        %1455 = vperm.xlu0 %1454, %v1429
        %v1456 = vpop.permute.xlu0 %1455
        %1459 = vset.pattern.permute.xlu0 1
        %1460 = vperm.xlu0 %1459, %v1430
        %v1461 = vpop.permute.xlu0 %1460
        %1464 = vset.pattern.permute.xlu0 1
        %1465 = vperm.xlu0 %1464, %v1431
        %v1466 = vpop.permute.xlu0 %1465
        %1469 = vset.pattern.permute.xlu0 1
        %1470 = vperm.xlu0 %1469, %v1432
        %v1471 = vpop.permute.xlu0 %1470
        %1474 = vset.pattern.permute.xlu0 1
        %1475 = vperm.xlu0 %1474, %v1433
        %v1476 = vpop.permute.xlu0 %1475
        %1479 = vset.pattern.permute.xlu0 1
        %1480 = vperm.xlu0 %1479, %v1434
        %v1481 = vpop.permute.xlu0 %1480
        %1484 = vset.pattern.permute.xlu0 1
        %1485 = vperm.xlu0 %1484, %v1435
        %v1486 = vpop.permute.xlu0 %1485
        %1489 = vset.pattern.permute.xlu0 1
        %1490 = vperm.xlu0 %1489, %v1436
        %v1491 = vpop.permute.xlu0 %1490
        %1494 = vset.pattern.permute.xlu0 1
        %1495 = vperm.xlu0 %1494, %v1437
        %v1496 = vpop.permute.xlu0 %1495
        %1499 = vset.pattern.permute.xlu0 1
        %1500 = vperm.xlu0 %1499, %v1438
        %v1501 = vpop.permute.xlu0 %1500
        %1504 = vset.pattern.permute.xlu0 1
        %1505 = vperm.xlu0 %1504, %v1439
        %v1506 = vpop.permute.xlu0 %1505
        %1509 = vset.pattern.permute.xlu0 1
        %1510 = vperm.xlu0 %1509, %v1440
        %v1511 = vpop.permute.xlu0 %1510
        %1514 = vset.pattern.permute.xlu0 1
        %1515 = vperm.xlu0 %1514, %v1441
        %v1516 = vpop.permute.xlu0 %1515
        %1519 = vset.pattern.permute.xlu0 1
        %1520 = vperm.xlu0 %1519, %v1442
        %v1521 = vpop.permute.xlu0 %1520
        %1524 = vset.pattern.permute.xlu0 1
        %1525 = vperm.xlu0 %1524, %v1443
        %v1526 = vpop.permute.xlu0 %1525
        %1529 = vset.pattern.permute.xlu0 1
        %1530 = vperm.xlu0 %1529, %v1444
        %v1531 = vpop.permute.xlu0 %1530
        %v1533 = vsub.f32 %v1449, %v1456
        %v1534 = vsub.f32 %v1450, %v1456
        %v1535 = vsub.f32 %v1449, %v1461
        %v1536 = vsub.f32 %v1450, %v1461
        %v1537 = vsub.f32 %v1449, %v1466
        %v1538 = vsub.f32 %v1450, %v1466
        %v1539 = vsub.f32 %v1449, %v1471
        %v1540 = vsub.f32 %v1450, %v1471
        %v1541 = vsub.f32 %v1449, %v1476
        %v1542 = vsub.f32 %v1450, %v1476
        %v1543 = vsub.f32 %v1449, %v1481
        %v1544 = vsub.f32 %v1450, %v1481
        %v1545 = vsub.f32 %v1449, %v1486
        %v1546 = vsub.f32 %v1450, %v1486
        %v1547 = vsub.f32 %v1449, %v1491
        %v1548 = vsub.f32 %v1450, %v1491
        %v1549 = vsub.f32 %v1449, %v1496
        %v1550 = vsub.f32 %v1450, %v1496
        %v1551 = vsub.f32 %v1449, %v1501
        %v1552 = vsub.f32 %v1450, %v1501
        %v1553 = vsub.f32 %v1449, %v1506
        %v1554 = vsub.f32 %v1450, %v1506
        %v1555 = vsub.f32 %v1449, %v1511
        %v1556 = vsub.f32 %v1450, %v1511
        %v1557 = vsub.f32 %v1449, %v1516
        %v1558 = vsub.f32 %v1450, %v1516
        %v1559 = vsub.f32 %v1449, %v1521
        %v1560 = vsub.f32 %v1450, %v1521
        %v1561 = vsub.f32 %v1449, %v1526
        %v1562 = vsub.f32 %v1450, %v1526
        %v1563 = vsub.f32 %v1449, %v1531
        %v1564 = vsub.f32 %v1450, %v1531
        %v1565 = vand.u32 2147483647, %v1533
        %v1566 = vand.u32 2147483647, %v1534
        %v1567 = vand.u32 2147483647, %v1535
        %v1568 = vand.u32 2147483647, %v1536
        %v1569 = vand.u32 2147483647, %v1537
        %v1570 = vand.u32 2147483647, %v1538
        %v1571 = vand.u32 2147483647, %v1539
        %v1572 = vand.u32 2147483647, %v1540
        %v1573 = vand.u32 2147483647, %v1541
        %v1574 = vand.u32 2147483647, %v1542
        %v1575 = vand.u32 2147483647, %v1543
        %v1576 = vand.u32 2147483647, %v1544
        %v1577 = vand.u32 2147483647, %v1545
        %v1578 = vand.u32 2147483647, %v1546
        %v1579 = vand.u32 2147483647, %v1547
        %v1580 = vand.u32 2147483647, %v1548
        %v1581 = vand.u32 2147483647, %v1549
        %v1582 = vand.u32 2147483647, %v1550
        %v1583 = vand.u32 2147483647, %v1551
        %v1584 = vand.u32 2147483647, %v1552
        %v1585 = vand.u32 2147483647, %v1553
        %v1586 = vand.u32 2147483647, %v1554
        %v1587 = vand.u32 2147483647, %v1555
        %v1588 = vand.u32 2147483647, %v1556
        %v1589 = vand.u32 2147483647, %v1557
        %v1590 = vand.u32 2147483647, %v1558
        %v1591 = vand.u32 2147483647, %v1559
        %v1592 = vand.u32 2147483647, %v1560
        %v1593 = vand.u32 2147483647, %v1561
        %v1594 = vand.u32 2147483647, %v1562
        %v1595 = vand.u32 2147483647, %v1563
        %v1596 = vand.u32 2147483647, %v1564
        %v1597 = vsub.f32 1.0, %v1565
        %v1598 = vsub.f32 1.0, %v1566
        %v1599 = vsub.f32 1.0, %v1567
        %v1600 = vsub.f32 1.0, %v1568
        %v1601 = vsub.f32 1.0, %v1569
        %v1602 = vsub.f32 1.0, %v1570
        %v1603 = vsub.f32 1.0, %v1571
        %v1604 = vsub.f32 1.0, %v1572
        %v1605 = vsub.f32 1.0, %v1573
        %v1606 = vsub.f32 1.0, %v1574
        %v1607 = vsub.f32 1.0, %v1575
        %v1608 = vsub.f32 1.0, %v1576
        %v1609 = vsub.f32 1.0, %v1577
        %v1610 = vsub.f32 1.0, %v1578
        %v1611 = vsub.f32 1.0, %v1579
        %v1612 = vsub.f32 1.0, %v1580
        %v1613 = vsub.f32 1.0, %v1581
        %v1614 = vsub.f32 1.0, %v1582
        %v1615 = vsub.f32 1.0, %v1583
        %v1616 = vsub.f32 1.0, %v1584
        %v1617 = vsub.f32 1.0, %v1585
        %v1618 = vsub.f32 1.0, %v1586
        %v1619 = vsub.f32 1.0, %v1587
        %v1620 = vsub.f32 1.0, %v1588
        %v1621 = vsub.f32 1.0, %v1589
        %v1622 = vsub.f32 1.0, %v1590
        %v1623 = vsub.f32 1.0, %v1591
        %v1624 = vsub.f32 1.0, %v1592
        %v1625 = vsub.f32 1.0, %v1593
        %v1626 = vsub.f32 1.0, %v1594
        %v1627 = vsub.f32 1.0, %v1595
        %v1628 = vsub.f32 1.0, %v1596
        %v1629 = vmax.f32 %v1597, 0.0
        %v1630 = vmax.f32 %v1598, 0.0
        %v1631 = vmax.f32 %v1599, 0.0
        %v1632 = vmax.f32 %v1600, 0.0
        %v1633 = vmax.f32 %v1601, 0.0
        %v1634 = vmax.f32 %v1602, 0.0
        %v1635 = vmax.f32 %v1603, 0.0
        %v1636 = vmax.f32 %v1604, 0.0
        %v1637 = vmax.f32 %v1605, 0.0
        %v1638 = vmax.f32 %v1606, 0.0
        %v1639 = vmax.f32 %v1607, 0.0
        %v1640 = vmax.f32 %v1608, 0.0
        %v1641 = vmax.f32 %v1609, 0.0
        %v1642 = vmax.f32 %v1610, 0.0
        %v1643 = vmax.f32 %v1611, 0.0
        %v1644 = vmax.f32 %v1612, 0.0
        %v1645 = vmax.f32 %v1613, 0.0
        %v1646 = vmax.f32 %v1614, 0.0
        %v1647 = vmax.f32 %v1615, 0.0
        %v1648 = vmax.f32 %v1616, 0.0
        %v1649 = vmax.f32 %v1617, 0.0
        %v1650 = vmax.f32 %v1618, 0.0
        %v1651 = vmax.f32 %v1619, 0.0
        %v1652 = vmax.f32 %v1620, 0.0
        %v1653 = vmax.f32 %v1621, 0.0
        %v1654 = vmax.f32 %v1622, 0.0
        %v1655 = vmax.f32 %v1623, 0.0
        %v1656 = vmax.f32 %v1624, 0.0
        %v1657 = vmax.f32 %v1625, 0.0
        %v1658 = vmax.f32 %v1626, 0.0
        %v1659 = vmax.f32 %v1627, 0.0
        %v1660 = vmax.f32 %v1628, 0.0
        %v1662 = vperm.slane %v1447, 0
        %v1663 = vperm.slane %v1447, 1
        %1667 = vset.pattern.permute.xlu0 0
        %1668 = vperm.xlu0 %1667, %v1381
        %v1669 = vpop.permute.xlu0 %1668
        %1672 = vset.pattern.permute.xlu0 0
        %1673 = vperm.xlu0 %1672, %v1382
        %v1674 = vpop.permute.xlu0 %1673
        %1677 = vset.pattern.permute.xlu0 0
        %1678 = vperm.xlu0 %1677, %v1383
        %v1679 = vpop.permute.xlu0 %1678
        %1682 = vset.pattern.permute.xlu0 0
        %1683 = vperm.xlu0 %1682, %v1384
        %v1684 = vpop.permute.xlu0 %1683
        %1687 = vset.pattern.permute.xlu0 0
        %1688 = vperm.xlu0 %1687, %v1385
        %v1689 = vpop.permute.xlu0 %1688
        %1692 = vset.pattern.permute.xlu0 0
        %1693 = vperm.xlu0 %1692, %v1386
        %v1694 = vpop.permute.xlu0 %1693
        %1697 = vset.pattern.permute.xlu0 0
        %1698 = vperm.xlu0 %1697, %v1387
        %v1699 = vpop.permute.xlu0 %1698
        %1702 = vset.pattern.permute.xlu0 0
        %1703 = vperm.xlu0 %1702, %v1388
        %v1704 = vpop.permute.xlu0 %1703
        %1707 = vset.pattern.permute.xlu0 0
        %1708 = vperm.xlu0 %1707, %v1389
        %v1709 = vpop.permute.xlu0 %1708
        %1712 = vset.pattern.permute.xlu0 0
        %1713 = vperm.xlu0 %1712, %v1390
        %v1714 = vpop.permute.xlu0 %1713
        %1717 = vset.pattern.permute.xlu0 0
        %1718 = vperm.xlu0 %1717, %v1391
        %v1719 = vpop.permute.xlu0 %1718
        %1722 = vset.pattern.permute.xlu0 0
        %1723 = vperm.xlu0 %1722, %v1392
        %v1724 = vpop.permute.xlu0 %1723
        %1727 = vset.pattern.permute.xlu0 0
        %1728 = vperm.xlu0 %1727, %v1393
        %v1729 = vpop.permute.xlu0 %1728
        %1732 = vset.pattern.permute.xlu0 0
        %1733 = vperm.xlu0 %1732, %v1394
        %v1734 = vpop.permute.xlu0 %1733
        %1737 = vset.pattern.permute.xlu0 0
        %1738 = vperm.xlu0 %1737, %v1395
        %v1739 = vpop.permute.xlu0 %1738
        %1742 = vset.pattern.permute.xlu0 0
        %1743 = vperm.xlu0 %1742, %v1396
        %v1744 = vpop.permute.xlu0 %1743
        %v1746 = vsub.f32 %v1662, %v1669
        %v1747 = vsub.f32 %v1663, %v1669
        %v1748 = vsub.f32 %v1662, %v1674
        %v1749 = vsub.f32 %v1663, %v1674
        %v1750 = vsub.f32 %v1662, %v1679
        %v1751 = vsub.f32 %v1663, %v1679
        %v1752 = vsub.f32 %v1662, %v1684
        %v1753 = vsub.f32 %v1663, %v1684
        %v1754 = vsub.f32 %v1662, %v1689
        %v1755 = vsub.f32 %v1663, %v1689
        %v1756 = vsub.f32 %v1662, %v1694
        %v1757 = vsub.f32 %v1663, %v1694
        %v1758 = vsub.f32 %v1662, %v1699
        %v1759 = vsub.f32 %v1663, %v1699
        %v1760 = vsub.f32 %v1662, %v1704
        %v1761 = vsub.f32 %v1663, %v1704
        %v1762 = vsub.f32 %v1662, %v1709
        %v1763 = vsub.f32 %v1663, %v1709
        %v1764 = vsub.f32 %v1662, %v1714
        %v1765 = vsub.f32 %v1663, %v1714
        %v1766 = vsub.f32 %v1662, %v1719
        %v1767 = vsub.f32 %v1663, %v1719
        %v1768 = vsub.f32 %v1662, %v1724
        %v1769 = vsub.f32 %v1663, %v1724
        %v1770 = vsub.f32 %v1662, %v1729
        %v1771 = vsub.f32 %v1663, %v1729
        %v1772 = vsub.f32 %v1662, %v1734
        %v1773 = vsub.f32 %v1663, %v1734
        %v1774 = vsub.f32 %v1662, %v1739
        %v1775 = vsub.f32 %v1663, %v1739
        %v1776 = vsub.f32 %v1662, %v1744
        %v1777 = vsub.f32 %v1663, %v1744
        %v1778 = vand.u32 2147483647, %v1746
        %v1779 = vand.u32 2147483647, %v1747
        %v1780 = vand.u32 2147483647, %v1748
        %v1781 = vand.u32 2147483647, %v1749
        %v1782 = vand.u32 2147483647, %v1750
        %v1783 = vand.u32 2147483647, %v1751
        %v1784 = vand.u32 2147483647, %v1752
        %v1785 = vand.u32 2147483647, %v1753
        %v1786 = vand.u32 2147483647, %v1754
        %v1787 = vand.u32 2147483647, %v1755
        %v1788 = vand.u32 2147483647, %v1756
        %v1789 = vand.u32 2147483647, %v1757
        %v1790 = vand.u32 2147483647, %v1758
        %v1791 = vand.u32 2147483647, %v1759
        %v1792 = vand.u32 2147483647, %v1760
        %v1793 = vand.u32 2147483647, %v1761
        %v1794 = vand.u32 2147483647, %v1762
        %v1795 = vand.u32 2147483647, %v1763
        %v1796 = vand.u32 2147483647, %v1764
        %v1797 = vand.u32 2147483647, %v1765
        %v1798 = vand.u32 2147483647, %v1766
        %v1799 = vand.u32 2147483647, %v1767
        %v1800 = vand.u32 2147483647, %v1768
        %v1801 = vand.u32 2147483647, %v1769
        %v1802 = vand.u32 2147483647, %v1770
        %v1803 = vand.u32 2147483647, %v1771
        %v1804 = vand.u32 2147483647, %v1772
        %v1805 = vand.u32 2147483647, %v1773
        %v1806 = vand.u32 2147483647, %v1774
        %v1807 = vand.u32 2147483647, %v1775
        %v1808 = vand.u32 2147483647, %v1776
        %v1809 = vand.u32 2147483647, %v1777
        %v1810 = vsub.f32 1.0, %v1778
        %v1811 = vsub.f32 1.0, %v1779
        %v1812 = vsub.f32 1.0, %v1780
        %v1813 = vsub.f32 1.0, %v1781
        %v1814 = vsub.f32 1.0, %v1782
        %v1815 = vsub.f32 1.0, %v1783
        %v1816 = vsub.f32 1.0, %v1784
        %v1817 = vsub.f32 1.0, %v1785
        %v1818 = vsub.f32 1.0, %v1786
        %v1819 = vsub.f32 1.0, %v1787
        %v1820 = vsub.f32 1.0, %v1788
        %v1821 = vsub.f32 1.0, %v1789
        %v1822 = vsub.f32 1.0, %v1790
        %v1823 = vsub.f32 1.0, %v1791
        %v1824 = vsub.f32 1.0, %v1792
        %v1825 = vsub.f32 1.0, %v1793
        %v1826 = vsub.f32 1.0, %v1794
        %v1827 = vsub.f32 1.0, %v1795
        %v1828 = vsub.f32 1.0, %v1796
        %v1829 = vsub.f32 1.0, %v1797
        %v1830 = vsub.f32 1.0, %v1798
        %v1831 = vsub.f32 1.0, %v1799
        %v1832 = vsub.f32 1.0, %v1800
        %v1833 = vsub.f32 1.0, %v1801
        %v1834 = vsub.f32 1.0, %v1802
        %v1835 = vsub.f32 1.0, %v1803
        %v1836 = vsub.f32 1.0, %v1804
        %v1837 = vsub.f32 1.0, %v1805
        %v1838 = vsub.f32 1.0, %v1806
        %v1839 = vsub.f32 1.0, %v1807
        %v1840 = vsub.f32 1.0, %v1808
        %v1841 = vsub.f32 1.0, %v1809
        %v1842 = vmax.f32 %v1810, 0.0
        %v1843 = vmax.f32 %v1811, 0.0
        %v1844 = vmax.f32 %v1812, 0.0
        %v1845 = vmax.f32 %v1813, 0.0
        %v1846 = vmax.f32 %v1814, 0.0
        %v1847 = vmax.f32 %v1815, 0.0
        %v1848 = vmax.f32 %v1816, 0.0
        %v1849 = vmax.f32 %v1817, 0.0
        %v1850 = vmax.f32 %v1818, 0.0
        %v1851 = vmax.f32 %v1819, 0.0
        %v1852 = vmax.f32 %v1820, 0.0
        %v1853 = vmax.f32 %v1821, 0.0
        %v1854 = vmax.f32 %v1822, 0.0
        %v1855 = vmax.f32 %v1823, 0.0
        %v1856 = vmax.f32 %v1824, 0.0
        %v1857 = vmax.f32 %v1825, 0.0
        %v1858 = vmax.f32 %v1826, 0.0
        %v1859 = vmax.f32 %v1827, 0.0
        %v1860 = vmax.f32 %v1828, 0.0
        %v1861 = vmax.f32 %v1829, 0.0
        %v1862 = vmax.f32 %v1830, 0.0
        %v1863 = vmax.f32 %v1831, 0.0
        %v1864 = vmax.f32 %v1832, 0.0
        %v1865 = vmax.f32 %v1833, 0.0
        %v1866 = vmax.f32 %v1834, 0.0
        %v1867 = vmax.f32 %v1835, 0.0
        %v1868 = vmax.f32 %v1836, 0.0
        %v1869 = vmax.f32 %v1837, 0.0
        %v1870 = vmax.f32 %v1838, 0.0
        %v1871 = vmax.f32 %v1839, 0.0
        %v1872 = vmax.f32 %v1840, 0.0
        %v1873 = vmax.f32 %v1841, 0.0
        %v1874 = vmul.f32 %v1629, %v1842
        %v1875 = vmul.f32 %v1630, %v1843
        %v1876 = vmul.f32 %v1631, %v1844
        %v1877 = vmul.f32 %v1632, %v1845
        %v1878 = vmul.f32 %v1633, %v1846
        %v1879 = vmul.f32 %v1634, %v1847
        %v1880 = vmul.f32 %v1635, %v1848
        %v1881 = vmul.f32 %v1636, %v1849
        %v1882 = vmul.f32 %v1637, %v1850
        %v1883 = vmul.f32 %v1638, %v1851
        %v1884 = vmul.f32 %v1639, %v1852
        %v1885 = vmul.f32 %v1640, %v1853
        %v1886 = vmul.f32 %v1641, %v1854
        %v1887 = vmul.f32 %v1642, %v1855
        %v1888 = vmul.f32 %v1643, %v1856
        %v1889 = vmul.f32 %v1644, %v1857
        %v1890 = vmul.f32 %v1645, %v1858
        %v1891 = vmul.f32 %v1646, %v1859
        %v1892 = vmul.f32 %v1647, %v1860
        %v1893 = vmul.f32 %v1648, %v1861
        %v1894 = vmul.f32 %v1649, %v1862
        %v1895 = vmul.f32 %v1650, %v1863
        %v1896 = vmul.f32 %v1651, %v1864
        %v1897 = vmul.f32 %v1652, %v1865
        %v1898 = vmul.f32 %v1653, %v1866
        %v1899 = vmul.f32 %v1654, %v1867
        %v1900 = vmul.f32 %v1655, %v1868
        %v1901 = vmul.f32 %v1656, %v1869
        %v1902 = vmul.f32 %v1657, %v1870
        %v1903 = vmul.f32 %v1658, %v1871
        %v1904 = vmul.f32 %v1659, %v1872
        %v1905 = vmul.f32 %v1660, %v1873
        %v1906 = vpack.c.bf16 %v1876, %v1874
        %v1907 = vpack.c.bf16 %v1877, %v1875
        %v1908 = vpack.c.bf16 %v1880, %v1878
        %v1909 = vpack.c.bf16 %v1881, %v1879
        %v1910 = vpack.c.bf16 %v1884, %v1882
        %v1911 = vpack.c.bf16 %v1885, %v1883
        %v1912 = vpack.c.bf16 %v1888, %v1886
        %v1913 = vpack.c.bf16 %v1889, %v1887
        %v1914 = vpack.c.bf16 %v1892, %v1890
        %v1915 = vpack.c.bf16 %v1893, %v1891
        %v1916 = vpack.c.bf16 %v1896, %v1894
        %v1917 = vpack.c.bf16 %v1897, %v1895
        %v1918 = vpack.c.bf16 %v1900, %v1898
        %v1919 = vpack.c.bf16 %v1901, %v1899
        %v1920 = vpack.c.bf16 %v1904, %v1902
        %v1921 = vpack.c.bf16 %v1905, %v1903
        %v1922 = vld [vmem:[%s479] sm:$0xf]
        %v1923 = vld [vmem:[%s479 + $0x4] sm:$0xf]
        %v1924 = vld [vmem:[%s479 + $0x8] sm:$0xf]
        %v1925 = vld [vmem:[%s479 + $0xc] sm:$0xf]
        %v1926 = vld [vmem:[%s479 + $0x10] sm:$0xf]
        %v1927 = vld [vmem:[%s479 + $0x14] sm:$0xf]
        %v1928 = vld [vmem:[%s479 + $0x18] sm:$0xf]
        %v1929 = vld [vmem:[%s479 + $0x1c] sm:$0xf]
        %v1930 = vld [vmem:[%s479 + $0x20] sm:$0xf]
        %v1931 = vld [vmem:[%s479 + $0x24] sm:$0xf]
        %v1932 = vld [vmem:[%s479 + $0x28] sm:$0xf]
        %v1933 = vld [vmem:[%s479 + $0x2c] sm:$0xf]
        %v1934 = vld [vmem:[%s479 + $0x30] sm:$0xf]
        %v1935 = vld [vmem:[%s479 + $0x34] sm:$0xf]
        %v1936 = vld [vmem:[%s479 + $0x38] sm:$0xf]
        %v1937 = vld [vmem:[%s479 + $0x3c] sm:$0xf]
        %v1938 = vld [vmem:[%s479 + $0x40] sm:$0xf]
        %v1939 = vld [vmem:[%s479 + $0x44] sm:$0xf]
        %v1940 = vld [vmem:[%s479 + $0x48] sm:$0xf]
        %v1941 = vld [vmem:[%s479 + $0x4c] sm:$0xf]
        %v1942 = vld [vmem:[%s479 + $0x50] sm:$0xf]
        %v1943 = vld [vmem:[%s479 + $0x54] sm:$0xf]
        %v1944 = vld [vmem:[%s479 + $0x58] sm:$0xf]
        %v1945 = vld [vmem:[%s479 + $0x5c] sm:$0xf]
        %v1946 = vld [vmem:[%s479 + $0x60] sm:$0xf]
        %v1947 = vld [vmem:[%s479 + $0x64] sm:$0xf]
        %v1948 = vld [vmem:[%s479 + $0x68] sm:$0xf]
        %v1949 = vld [vmem:[%s479 + $0x6c] sm:$0xf]
        %v1950 = vld [vmem:[%s479 + $0x70] sm:$0xf]
        %v1951 = vld [vmem:[%s479 + $0x74] sm:$0xf]
        %v1952 = vld [vmem:[%s479 + $0x78] sm:$0xf]
        %v1953 = vld [vmem:[%s479 + $0x7c] sm:$0xf]
        %v1986 = vunpack.c.l.b16 %v1922
        %v1987 = vunpack.c.l.b16 %v1923
        %v1988 = vunpack.c.l.b16 %v1924
        %v1989 = vunpack.c.l.b16 %v1925
        %v1990 = vunpack.c.l.b16 %v1926
        %v1991 = vunpack.c.l.b16 %v1927
        %v1992 = vunpack.c.l.b16 %v1928
        %v1993 = vunpack.c.l.b16 %v1929
        %v1994 = vunpack.c.l.b16 %v1930
        %v1995 = vunpack.c.l.b16 %v1931
        %v1996 = vunpack.c.l.b16 %v1932
        %v1997 = vunpack.c.l.b16 %v1933
        %v1998 = vunpack.c.l.b16 %v1934
        %v1999 = vunpack.c.l.b16 %v1935
        %v2000 = vunpack.c.l.b16 %v1936
        %v2001 = vunpack.c.l.b16 %v1937
        %v2002 = vunpack.c.l.b16 %v1938
        %v2003 = vunpack.c.l.b16 %v1939
        %v2004 = vunpack.c.l.b16 %v1940
        %v2005 = vunpack.c.l.b16 %v1941
        %v2006 = vunpack.c.l.b16 %v1942
        %v2007 = vunpack.c.l.b16 %v1943
        %v2008 = vunpack.c.l.b16 %v1944
        %v2009 = vunpack.c.l.b16 %v1945
        %v2010 = vunpack.c.l.b16 %v1946
        %v2011 = vunpack.c.l.b16 %v1947
        %v2012 = vunpack.c.l.b16 %v1948
        %v2013 = vunpack.c.l.b16 %v1949
        %v2014 = vunpack.c.l.b16 %v1950
        %v2015 = vunpack.c.l.b16 %v1951
        %v2016 = vunpack.c.l.b16 %v1952
        %v2017 = vunpack.c.l.b16 %v1953
        %v2018 = vpack.c.b16 %v1987, %v1986
        %v2019 = vpack.c.b16 %v1989, %v1988
        %v2020 = vpack.c.b16 %v1991, %v1990
        %v2021 = vpack.c.b16 %v1993, %v1992
        %v2022 = vpack.c.b16 %v1995, %v1994
        %v2023 = vpack.c.b16 %v1997, %v1996
        %v2024 = vpack.c.b16 %v1999, %v1998
        %v2025 = vpack.c.b16 %v2001, %v2000
        %v2026 = vpack.c.b16 %v2003, %v2002
        %v2027 = vpack.c.b16 %v2005, %v2004
        %v2028 = vpack.c.b16 %v2007, %v2006
        %v2029 = vpack.c.b16 %v2009, %v2008
        %v2030 = vpack.c.b16 %v2011, %v2010
        %v2031 = vpack.c.b16 %v2013, %v2012
        %v2032 = vpack.c.b16 %v2015, %v2014
        %v2033 = vpack.c.b16 %v2017, %v2016
        %2050 = vmatpush.bf16.msra.mxu0 %v2025
        %2051 = vmatpush.bf16.msra.mxu0 %v2024
        %2052 = vmatpush.bf16.msra.mxu0 %v2023
        %2053 = vmatpush.bf16.msra.mxu0 %v2022
        %2054 = vmatpush.bf16.msra.mxu0 %v2021
        %2055 = vmatpush.bf16.msra.mxu0 %v2020
        %2056 = vmatpush.bf16.msra.mxu0 %v2019
        %2057 = vmatpush.bf16.msra.mxu0 %v2018
        %2058 = vmatmul.bf16.gmra.mxu0 %v1906
        %v2059 = vpop.f32.mrf.mxu0
        %v2060 = vadd.f32 0.0, %v2059
        %v2061 = vpop.f32.mrf.mxu0
        %v2062 = vadd.f32 0.0, %v2061
        %2063 = vmatmul.bf16.gmra.mxu0 %v1908
        %v2064 = vpop.f32.mrf.mxu0
        %v2065 = vadd.f32 0.0, %v2064
        %v2066 = vpop.f32.mrf.mxu0
        %v2067 = vadd.f32 0.0, %v2066
        %2068 = vmatmul.bf16.gmra.mxu0 %v1910
        %v2069 = vpop.f32.mrf.mxu0
        %v2070 = vadd.f32 0.0, %v2069
        %v2071 = vpop.f32.mrf.mxu0
        %v2072 = vadd.f32 0.0, %v2071
        %2073 = vmatmul.bf16.gmra.mxu0 %v1912
        %v2074 = vpop.f32.mrf.mxu0
        %v2075 = vadd.f32 0.0, %v2074
        %v2076 = vpop.f32.mrf.mxu0
        %v2077 = vadd.f32 0.0, %v2076
        %2078 = vmatmul.bf16.gmra.mxu0 %v1914
        %v2079 = vpop.f32.mrf.mxu0
        %v2080 = vadd.f32 0.0, %v2079
        %v2081 = vpop.f32.mrf.mxu0
        %v2082 = vadd.f32 0.0, %v2081
        %2083 = vmatmul.bf16.gmra.mxu0 %v1916
        %v2084 = vpop.f32.mrf.mxu0
        %v2085 = vadd.f32 0.0, %v2084
        %v2086 = vpop.f32.mrf.mxu0
        %v2087 = vadd.f32 0.0, %v2086
        %2088 = vmatmul.bf16.gmra.mxu0 %v1918
        %v2089 = vpop.f32.mrf.mxu0
        %v2090 = vadd.f32 0.0, %v2089
        %v2091 = vpop.f32.mrf.mxu0
        %v2092 = vadd.f32 0.0, %v2091
        %2093 = vmatmul.bf16.gmra.mxu0 %v1920
        %v2094 = vpop.f32.mrf.mxu0
        %v2095 = vadd.f32 0.0, %v2094
        %v2096 = vpop.f32.mrf.mxu0
        %v2097 = vadd.f32 0.0, %v2096
        %2098 = vdwg.mxu0
        %2099 = vmatpush.bf16.msra.mxu0 %v2033
        %2100 = vmatpush.bf16.msra.mxu0 %v2032
        %2101 = vmatpush.bf16.msra.mxu0 %v2031
        %2102 = vmatpush.bf16.msra.mxu0 %v2030
        %2103 = vmatpush.bf16.msra.mxu0 %v2029
        %2104 = vmatpush.bf16.msra.mxu0 %v2028
        %2105 = vmatpush.bf16.msra.mxu0 %v2027
        %2106 = vmatpush.bf16.msra.mxu0 %v2026
        %2107 = vmatmul.bf16.gmra.mxu0 %v1907
        %v2108 = vpop.f32.mrf.mxu0
        %v2109 = vadd.f32 %v2060, %v2108
        %v2110 = vpop.f32.mrf.mxu0
        %v2111 = vadd.f32 %v2062, %v2110
        %2112 = vmatmul.bf16.gmra.mxu0 %v1909
        %v2113 = vpop.f32.mrf.mxu0
        %v2114 = vadd.f32 %v2065, %v2113
        %v2115 = vpop.f32.mrf.mxu0
        %v2116 = vadd.f32 %v2067, %v2115
        %2117 = vmatmul.bf16.gmra.mxu0 %v1911
        %v2118 = vpop.f32.mrf.mxu0
        %v2119 = vadd.f32 %v2070, %v2118
        %v2120 = vpop.f32.mrf.mxu0
        %v2121 = vadd.f32 %v2072, %v2120
        %2122 = vmatmul.bf16.gmra.mxu0 %v1913
        %v2123 = vpop.f32.mrf.mxu0
        %v2124 = vadd.f32 %v2075, %v2123
        %v2125 = vpop.f32.mrf.mxu0
        %v2126 = vadd.f32 %v2077, %v2125
        %2127 = vmatmul.bf16.gmra.mxu0 %v1915
        %v2128 = vpop.f32.mrf.mxu0
        %v2129 = vadd.f32 %v2080, %v2128
        %v2130 = vpop.f32.mrf.mxu0
        %v2131 = vadd.f32 %v2082, %v2130
        %2132 = vmatmul.bf16.gmra.mxu0 %v1917
        %v2133 = vpop.f32.mrf.mxu0
        %v2134 = vadd.f32 %v2085, %v2133
        %v2135 = vpop.f32.mrf.mxu0
        %v2136 = vadd.f32 %v2087, %v2135
        %2137 = vmatmul.bf16.gmra.mxu0 %v1919
        %v2138 = vpop.f32.mrf.mxu0
        %v2139 = vadd.f32 %v2090, %v2138
        %v2140 = vpop.f32.mrf.mxu0
        %v2141 = vadd.f32 %v2092, %v2140
        %2142 = vmatmul.bf16.gmra.mxu0 %v1921
        %v2143 = vpop.f32.mrf.mxu0
        %v2144 = vadd.f32 %v2095, %v2143
        %v2145 = vpop.f32.mrf.mxu0
        %v2146 = vadd.f32 %v2097, %v2145
        %2147 = vdwg.mxu0
        %v2148 = vpack.c.bf16 %v1262, %v1262
        %v2149 = vpack.c.bf16 %v1264, %v1264
        %v2150 = vpack.c.bf16 %v1267, %v1267
        %v2151 = vpack.c.bf16 %v1269, %v1269
        %v2152 = vpack.c.bf16 %v1272, %v1272
        %v2153 = vpack.c.bf16 %v1274, %v1274
        %v2154 = vpack.c.bf16 %v1277, %v1277
        %v2155 = vpack.c.bf16 %v1279, %v1279
        %v2156 = vpack.c.bf16 %v1282, %v1282
        %v2157 = vpack.c.bf16 %v1284, %v1284
        %v2158 = vpack.c.bf16 %v1287, %v1287
        %v2159 = vpack.c.bf16 %v1289, %v1289
        %v2160 = vpack.c.bf16 %v1292, %v1292
        %v2161 = vpack.c.bf16 %v1294, %v1294
        %v2162 = vpack.c.bf16 %v1297, %v1297
        %v2163 = vpack.c.bf16 %v1299, %v1299
        %v2164 = vpack.c.bf16 %v2109, %v2109
        %v2165 = vpack.c.bf16 %v2111, %v2111
        %v2166 = vpack.c.bf16 %v2114, %v2114
        %v2167 = vpack.c.bf16 %v2116, %v2116
        %v2168 = vpack.c.bf16 %v2119, %v2119
        %v2169 = vpack.c.bf16 %v2121, %v2121
        %v2170 = vpack.c.bf16 %v2124, %v2124
        %v2171 = vpack.c.bf16 %v2126, %v2126
        %v2172 = vpack.c.bf16 %v2129, %v2129
        %v2173 = vpack.c.bf16 %v2131, %v2131
        %v2174 = vpack.c.bf16 %v2134, %v2134
        %v2175 = vpack.c.bf16 %v2136, %v2136
        %v2176 = vpack.c.bf16 %v2139, %v2139
        %v2177 = vpack.c.bf16 %v2141, %v2141
        %v2178 = vpack.c.bf16 %v2144, %v2144
        %v2179 = vpack.c.bf16 %v2146, %v2146
        %v2196 = vunpack.c.l.b16 %v502
        %v2197 = vunpack.c.l.b16 %v503
        %v2198 = vunpack.c.l.b16 %v504
        %v2199 = vunpack.c.l.b16 %v505
        %v2200 = vunpack.c.l.b16 %v506
        %v2201 = vunpack.c.l.b16 %v507
        %v2202 = vunpack.c.l.b16 %v508
        %v2203 = vunpack.c.l.b16 %v509
        %v2204 = vunpack.c.l.b16 %v510
        %v2205 = vunpack.c.l.b16 %v511
        %v2206 = vunpack.c.l.b16 %v512
        %v2207 = vunpack.c.l.b16 %v513
        %v2208 = vunpack.c.l.b16 %v514
        %v2209 = vunpack.c.l.b16 %v515
        %v2210 = vunpack.c.l.b16 %v516
        %v2211 = vunpack.c.l.b16 %v517
        %v2212 = vpack.c.b16 %v2197, %v2196
        %v2213 = vpack.c.b16 %v2199, %v2198
        %v2214 = vpack.c.b16 %v2201, %v2200
        %v2215 = vpack.c.b16 %v2203, %v2202
        %v2216 = vpack.c.b16 %v2205, %v2204
        %v2217 = vpack.c.b16 %v2207, %v2206
        %v2218 = vpack.c.b16 %v2209, %v2208
        %v2219 = vpack.c.b16 %v2211, %v2210
        %v2236 = vunpack.c.l.b16 %v2148
        %v2237 = vunpack.c.l.b16 %v2149
        %v2238 = vunpack.c.l.b16 %v2150
        %v2239 = vunpack.c.l.b16 %v2151
        %v2240 = vunpack.c.l.b16 %v2152
        %v2241 = vunpack.c.l.b16 %v2153
        %v2242 = vunpack.c.l.b16 %v2154
        %v2243 = vunpack.c.l.b16 %v2155
        %v2244 = vunpack.c.l.b16 %v2156
        %v2245 = vunpack.c.l.b16 %v2157
        %v2246 = vunpack.c.l.b16 %v2158
        %v2247 = vunpack.c.l.b16 %v2159
        %v2248 = vunpack.c.l.b16 %v2160
        %v2249 = vunpack.c.l.b16 %v2161
        %v2250 = vunpack.c.l.b16 %v2162
        %v2251 = vunpack.c.l.b16 %v2163
        %v2252 = vpack.c.b16 %v2237, %v2236
        %v2253 = vpack.c.b16 %v2239, %v2238
        %v2254 = vpack.c.b16 %v2241, %v2240
        %v2255 = vpack.c.b16 %v2243, %v2242
        %v2256 = vpack.c.b16 %v2245, %v2244
        %v2257 = vpack.c.b16 %v2247, %v2246
        %v2258 = vpack.c.b16 %v2249, %v2248
        %v2259 = vpack.c.b16 %v2251, %v2250
        %2260 = vrot.lane.b32.xlu0 %v2252, 32
        %v2261 = vpop.permute.xlu0 %2260
        %2262 = vrot.lane.b32.xlu0 %v2253, 32
        %v2263 = vpop.permute.xlu0 %2262
        %2264 = vrot.lane.b32.xlu0 %v2254, 32
        %v2265 = vpop.permute.xlu0 %2264
        %2266 = vrot.lane.b32.xlu0 %v2255, 32
        %v2267 = vpop.permute.xlu0 %2266
        %2268 = vrot.lane.b32.xlu0 %v2256, 32
        %v2269 = vpop.permute.xlu0 %2268
        %2270 = vrot.lane.b32.xlu0 %v2257, 32
        %v2271 = vpop.permute.xlu0 %2270
        %2272 = vrot.lane.b32.xlu0 %v2258, 32
        %v2273 = vpop.permute.xlu0 %2272
        %2274 = vrot.lane.b32.xlu0 %v2259, 32
        %v2275 = vpop.permute.xlu0 %2274
        %v2292 = vunpack.c.l.b16 %v2164
        %v2293 = vunpack.c.l.b16 %v2165
        %v2294 = vunpack.c.l.b16 %v2166
        %v2295 = vunpack.c.l.b16 %v2167
        %v2296 = vunpack.c.l.b16 %v2168
        %v2297 = vunpack.c.l.b16 %v2169
        %v2298 = vunpack.c.l.b16 %v2170
        %v2299 = vunpack.c.l.b16 %v2171
        %v2300 = vunpack.c.l.b16 %v2172
        %v2301 = vunpack.c.l.b16 %v2173
        %v2302 = vunpack.c.l.b16 %v2174
        %v2303 = vunpack.c.l.b16 %v2175
        %v2304 = vunpack.c.l.b16 %v2176
        %v2305 = vunpack.c.l.b16 %v2177
        %v2306 = vunpack.c.l.b16 %v2178
        %v2307 = vunpack.c.l.b16 %v2179
        %v2308 = vpack.c.b16 %v2293, %v2292
        %v2309 = vpack.c.b16 %v2295, %v2294
        %v2310 = vpack.c.b16 %v2297, %v2296
        %v2311 = vpack.c.b16 %v2299, %v2298
        %v2312 = vpack.c.b16 %v2301, %v2300
        %v2313 = vpack.c.b16 %v2303, %v2302
        %v2314 = vpack.c.b16 %v2305, %v2304
        %v2315 = vpack.c.b16 %v2307, %v2306
        %2316 = vrot.lane.b32.xlu0 %v2308, 96
        %v2317 = vpop.permute.xlu0 %2316
        %2318 = vrot.lane.b32.xlu0 %v2309, 96
        %v2319 = vpop.permute.xlu0 %2318
        %2320 = vrot.lane.b32.xlu0 %v2310, 96
        %v2321 = vpop.permute.xlu0 %2320
        %2322 = vrot.lane.b32.xlu0 %v2311, 96
        %v2323 = vpop.permute.xlu0 %2322
        %2324 = vrot.lane.b32.xlu0 %v2312, 96
        %v2325 = vpop.permute.xlu0 %2324
        %2326 = vrot.lane.b32.xlu0 %v2313, 96
        %v2327 = vpop.permute.xlu0 %2326
        %2328 = vrot.lane.b32.xlu0 %v2314, 96
        %v2329 = vpop.permute.xlu0 %2328
        %2330 = vrot.lane.b32.xlu0 %v2315, 96
        %v2331 = vpop.permute.xlu0 %2330
        %vm2332 = vcmask 261120
        %v2335 = vsel %vm2332, %v2212, %v2261
        %v2338 = vsel %vm2332, %v2213, %v2263
        %v2341 = vsel %vm2332, %v2214, %v2265
        %v2344 = vsel %vm2332, %v2215, %v2267
        %v2347 = vsel %vm2332, %v2216, %v2269
        %v2350 = vsel %vm2332, %v2217, %v2271
        %v2353 = vsel %vm2332, %v2218, %v2273
        %v2356 = vsel %vm2332, %v2219, %v2275
        %vm2357 = vcmask 785408
        %v2359 = vsel %vm2357, %v2335, %v2317
        %v2362 = vsel %vm2357, %v2338, %v2319
        %v2365 = vsel %vm2357, %v2341, %v2321
        %v2368 = vsel %vm2357, %v2344, %v2323
        %v2371 = vsel %vm2357, %v2347, %v2325
        %v2374 = vsel %vm2357, %v2350, %v2327
        %v2377 = vsel %vm2357, %v2353, %v2329
        %v2380 = vsel %vm2357, %v2356, %v2331
        %v2382 = vld [vmem:[%s7] sm:$0xf]
        %v2383 = vld [vmem:[%s7 + $0x4] sm:$0xf]
        %v2384 = vld [vmem:[%s7 + $0x8] sm:$0xf]
        %v2385 = vld [vmem:[%s7 + $0xc] sm:$0xf]
        %v2386 = vld [vmem:[%s7 + $0x10] sm:$0xf]
        %v2387 = vld [vmem:[%s7 + $0x14] sm:$0xf]
        %v2388 = vld [vmem:[%s7 + $0x18] sm:$0xf]
        %v2389 = vld [vmem:[%s7 + $0x1c] sm:$0xf]
        %v2390 = vld [vmem:[%s7 + $0x20] sm:$0xf]
        %v2391 = vld [vmem:[%s7 + $0x24] sm:$0xf]
        %v2392 = vld [vmem:[%s7 + $0x28] sm:$0xf]
        %v2393 = vld [vmem:[%s7 + $0x2c] sm:$0xf]
        %v2394 = vld [vmem:[%s7 + $0x30] sm:$0xf]
        %v2395 = vld [vmem:[%s7 + $0x34] sm:$0xf]
        %v2396 = vld [vmem:[%s7 + $0x38] sm:$0xf]
        %v2397 = vld [vmem:[%s7 + $0x3c] sm:$0xf]
        %v2398 = vld [vmem:[%s7 + $0x40] sm:$0xf]
        %v2399 = vld [vmem:[%s7 + $0x44] sm:$0xf]
        %v2400 = vld [vmem:[%s7 + $0x48] sm:$0xf]
        %v2401 = vld [vmem:[%s7 + $0x4c] sm:$0xf]
        %v2402 = vld [vmem:[%s9] sm:$0x1]
        %v2403 = vperm.slane %v2402, 0
        %v2424 = vunpack.c.l.b16 %v2382
        %v2425 = vunpack.c.l.b16 %v2383
        %v2426 = vunpack.c.l.b16 %v2384
        %v2427 = vunpack.c.l.b16 %v2385
        %v2428 = vunpack.c.l.b16 %v2386
        %v2429 = vunpack.c.l.b16 %v2387
        %v2430 = vunpack.c.l.b16 %v2388
        %v2431 = vunpack.c.l.b16 %v2389
        %v2432 = vunpack.c.l.b16 %v2390
        %v2433 = vunpack.c.l.b16 %v2391
        %v2434 = vunpack.c.l.b16 %v2392
        %v2435 = vunpack.c.l.b16 %v2393
        %v2436 = vunpack.c.l.b16 %v2394
        %v2437 = vunpack.c.l.b16 %v2395
        %v2438 = vunpack.c.l.b16 %v2396
        %v2439 = vunpack.c.l.b16 %v2397
        %v2440 = vunpack.c.l.b16 %v2398
        %v2441 = vunpack.c.l.b16 %v2399
        %v2442 = vunpack.c.l.b16 %v2400
        %v2443 = vunpack.c.l.b16 %v2401
        %v2444 = vpack.c.b16 %v2425, %v2424
        %v2445 = vpack.c.b16 %v2427, %v2426
        %v2446 = vpack.c.b16 %v2429, %v2428
        %v2447 = vpack.c.b16 %v2431, %v2430
        %v2448 = vpack.c.b16 %v2433, %v2432
        %v2449 = vpack.c.b16 %v2435, %v2434
        %v2450 = vpack.c.b16 %v2437, %v2436
        %v2451 = vpack.c.b16 %v2439, %v2438
        %v2452 = vpack.c.b16 %v2441, %v2440
        %v2453 = vpack.c.b16 %v2443, %v2442
        %v2464 = vsel %vm2332, %v2317, 0
        %v2466 = vsel %vm2332, %v2319, 0
        %v2468 = vsel %vm2332, %v2321, 0
        %v2470 = vsel %vm2332, %v2323, 0
        %v2472 = vsel %vm2332, %v2325, 0
        %v2474 = vsel %vm2332, %v2327, 0
        %v2476 = vsel %vm2332, %v2329, 0
        %v2478 = vsel %vm2332, %v2331, 0
        %2480 = vmatpush.bf16.msra.mxu0 %v2451
        %2481 = vmatpush.bf16.msra.mxu0 %v2450
        %2482 = vmatpush.bf16.msra.mxu0 %v2449
        %2483 = vmatpush.bf16.msra.mxu0 %v2448
        %2484 = vmatpush.bf16.msra.mxu0 %v2447
        %2485 = vmatpush.bf16.msra.mxu0 %v2446
        %2486 = vmatpush.bf16.msra.mxu0 %v2445
        %2487 = vmatpush.bf16.msra.mxu0 %v2444
        %2488 = vmatmul.bf16.gmra.mxu0 %v2359
        %v2489 = vpop.f32.mrf.mxu0
        %v2490 = vadd.f32 %v2403, %v2489
        %v2491 = vpop.f32.mrf.mxu0
        %v2492 = vadd.f32 %v2403, %v2491
        %2493 = vmatmul.bf16.gmra.mxu0 %v2362
        %v2494 = vpop.f32.mrf.mxu0
        %v2495 = vadd.f32 %v2403, %v2494
        %v2496 = vpop.f32.mrf.mxu0
        %v2497 = vadd.f32 %v2403, %v2496
        %2498 = vmatmul.bf16.gmra.mxu0 %v2365
        %v2499 = vpop.f32.mrf.mxu0
        %v2500 = vadd.f32 %v2403, %v2499
        %v2501 = vpop.f32.mrf.mxu0
        %v2502 = vadd.f32 %v2403, %v2501
        %2503 = vmatmul.bf16.gmra.mxu0 %v2368
        %v2504 = vpop.f32.mrf.mxu0
        %v2505 = vadd.f32 %v2403, %v2504
        %v2506 = vpop.f32.mrf.mxu0
        %v2507 = vadd.f32 %v2403, %v2506
        %2508 = vmatmul.bf16.gmra.mxu0 %v2371
        %v2509 = vpop.f32.mrf.mxu0
        %v2510 = vadd.f32 %v2403, %v2509
        %v2511 = vpop.f32.mrf.mxu0
        %v2512 = vadd.f32 %v2403, %v2511
        %2513 = vmatmul.bf16.gmra.mxu0 %v2374
        %v2514 = vpop.f32.mrf.mxu0
        %v2515 = vadd.f32 %v2403, %v2514
        %v2516 = vpop.f32.mrf.mxu0
        %v2517 = vadd.f32 %v2403, %v2516
        %2518 = vmatmul.bf16.gmra.mxu0 %v2377
        %v2519 = vpop.f32.mrf.mxu0
        %v2520 = vadd.f32 %v2403, %v2519
        %v2521 = vpop.f32.mrf.mxu0
        %v2522 = vadd.f32 %v2403, %v2521
        %2523 = vmatmul.bf16.gmra.mxu0 %v2380
        %v2524 = vpop.f32.mrf.mxu0
        %v2525 = vadd.f32 %v2403, %v2524
        %v2526 = vpop.f32.mrf.mxu0
        %v2527 = vadd.f32 %v2403, %v2526
        %2528 = vdwg.mxu0
        %2529 = vmatpush.bf16.msra.mxu0 0
        %2530 = vmatpush.bf16.msra.mxu0 0
        %2531 = vmatpush.bf16.msra.mxu0 0
        %2532 = vmatpush.bf16.msra.mxu0 0
        %2533 = vmatpush.bf16.msra.mxu0 0
        %2534 = vmatpush.bf16.msra.mxu0 0
        %2535 = vmatpush.bf16.msra.mxu0 %v2453
        %2536 = vmatpush.bf16.msra.mxu0 %v2452
        %2537 = vmatmul.bf16.gmra.mxu0 %v2464
        %v2538 = vpop.f32.mrf.mxu0
        %v2539 = vadd.f32 %v2490, %v2538
        %v2540 = vpop.f32.mrf.mxu0
        %v2541 = vadd.f32 %v2492, %v2540
        %2542 = vmatmul.bf16.gmra.mxu0 %v2466
        %v2543 = vpop.f32.mrf.mxu0
        %v2544 = vadd.f32 %v2495, %v2543
        %v2545 = vpop.f32.mrf.mxu0
        %v2546 = vadd.f32 %v2497, %v2545
        %2547 = vmatmul.bf16.gmra.mxu0 %v2468
        %v2548 = vpop.f32.mrf.mxu0
        %v2549 = vadd.f32 %v2500, %v2548
        %v2550 = vpop.f32.mrf.mxu0
        %v2551 = vadd.f32 %v2502, %v2550
        %2552 = vmatmul.bf16.gmra.mxu0 %v2470
        %v2553 = vpop.f32.mrf.mxu0
        %v2554 = vadd.f32 %v2505, %v2553
        %v2555 = vpop.f32.mrf.mxu0
        %v2556 = vadd.f32 %v2507, %v2555
        %2557 = vmatmul.bf16.gmra.mxu0 %v2472
        %v2558 = vpop.f32.mrf.mxu0
        %v2559 = vadd.f32 %v2510, %v2558
        %v2560 = vpop.f32.mrf.mxu0
        %v2561 = vadd.f32 %v2512, %v2560
        %2562 = vmatmul.bf16.gmra.mxu0 %v2474
        %v2563 = vpop.f32.mrf.mxu0
        %v2564 = vadd.f32 %v2515, %v2563
        %v2565 = vpop.f32.mrf.mxu0
        %v2566 = vadd.f32 %v2517, %v2565
        %2567 = vmatmul.bf16.gmra.mxu0 %v2476
        %v2568 = vpop.f32.mrf.mxu0
        %v2569 = vadd.f32 %v2520, %v2568
        %v2570 = vpop.f32.mrf.mxu0
        %v2571 = vadd.f32 %v2522, %v2570
        %2572 = vmatmul.bf16.gmra.mxu0 %v2478
        %v2573 = vpop.f32.mrf.mxu0
        %v2574 = vadd.f32 %v2525, %v2573
        %v2575 = vpop.f32.mrf.mxu0
        %v2576 = vadd.f32 %v2527, %v2575
        %2577 = vdwg.mxu0
        %v2578 = vmax.f32 %v2539, 0.0
        %v2579 = vmax.f32 %v2541, 0.0
        %v2580 = vmax.f32 %v2544, 0.0
        %v2581 = vmax.f32 %v2546, 0.0
        %v2582 = vmax.f32 %v2549, 0.0
        %v2583 = vmax.f32 %v2551, 0.0
        %v2584 = vmax.f32 %v2554, 0.0
        %v2585 = vmax.f32 %v2556, 0.0
        %v2586 = vmax.f32 %v2559, 0.0
        %v2587 = vmax.f32 %v2561, 0.0
        %v2588 = vmax.f32 %v2564, 0.0
        %v2589 = vmax.f32 %v2566, 0.0
        %v2590 = vmax.f32 %v2569, 0.0
        %v2591 = vmax.f32 %v2571, 0.0
        %v2592 = vmax.f32 %v2574, 0.0
        %v2593 = vmax.f32 %v2576, 0.0
        %v2594 = vpack.c.bf16 %v2579, %v2578
        %v2595 = vpack.c.bf16 %v2581, %v2580
        %v2596 = vpack.c.bf16 %v2583, %v2582
        %v2597 = vpack.c.bf16 %v2585, %v2584
        %v2598 = vpack.c.bf16 %v2587, %v2586
        %v2599 = vpack.c.bf16 %v2589, %v2588
        %v2600 = vpack.c.bf16 %v2591, %v2590
        %v2601 = vpack.c.bf16 %v2593, %v2592
        %v2602 = vld [vmem:[%s8] sm:$0xf]
        %v2603 = vld [vmem:[%s8 + $0x4] sm:$0xf]
        %v2604 = vld [vmem:[%s8 + $0x8] sm:$0xf]
        %v2605 = vld [vmem:[%s8 + $0xc] sm:$0xf]
        %v2606 = vld [vmem:[%s8 + $0x10] sm:$0xf]
        %v2607 = vld [vmem:[%s8 + $0x14] sm:$0xf]
        %v2608 = vld [vmem:[%s8 + $0x18] sm:$0xf]
        %v2609 = vld [vmem:[%s8 + $0x1c] sm:$0xf]
        %v2610 = vld [vmem:[%s8 + $0x20] sm:$0xf]
        %v2611 = vld [vmem:[%s8 + $0x24] sm:$0xf]
        %v2612 = vld [vmem:[%s8 + $0x28] sm:$0xf]
        %v2613 = vld [vmem:[%s8 + $0x2c] sm:$0xf]
        %v2614 = vld [vmem:[%s8 + $0x30] sm:$0xf]
        %v2615 = vld [vmem:[%s8 + $0x34] sm:$0xf]
        %v2616 = vld [vmem:[%s8 + $0x38] sm:$0xf]
        %v2617 = vld [vmem:[%s8 + $0x3c] sm:$0xf]
        %v2618 = vld [vmem:[%s9 + $0x1] sm:$0x1]
        %v2619 = vperm.slane %v2618, 0
        %v2636 = vunpack.c.l.b16 %v2602
        %v2637 = vunpack.c.l.b16 %v2603
        %v2638 = vunpack.c.l.b16 %v2604
        %v2639 = vunpack.c.l.b16 %v2605
        %v2640 = vunpack.c.l.b16 %v2606
        %v2641 = vunpack.c.l.b16 %v2607
        %v2642 = vunpack.c.l.b16 %v2608
        %v2643 = vunpack.c.l.b16 %v2609
        %v2644 = vunpack.c.l.b16 %v2610
        %v2645 = vunpack.c.l.b16 %v2611
        %v2646 = vunpack.c.l.b16 %v2612
        %v2647 = vunpack.c.l.b16 %v2613
        %v2648 = vunpack.c.l.b16 %v2614
        %v2649 = vunpack.c.l.b16 %v2615
        %v2650 = vunpack.c.l.b16 %v2616
        %v2651 = vunpack.c.l.b16 %v2617
        %v2652 = vpack.c.b16 %v2637, %v2636
        %v2653 = vpack.c.b16 %v2639, %v2638
        %v2654 = vpack.c.b16 %v2641, %v2640
        %v2655 = vpack.c.b16 %v2643, %v2642
        %v2656 = vpack.c.b16 %v2645, %v2644
        %v2657 = vpack.c.b16 %v2647, %v2646
        %v2658 = vpack.c.b16 %v2649, %v2648
        %v2659 = vpack.c.b16 %v2651, %v2650
        %2668 = vmatpush.bf16.msra.mxu0 %v2659
        %2669 = vmatpush.bf16.msra.mxu0 %v2658
        %2670 = vmatpush.bf16.msra.mxu0 %v2657
        %2671 = vmatpush.bf16.msra.mxu0 %v2656
        %2672 = vmatpush.bf16.msra.mxu0 %v2655
        %2673 = vmatpush.bf16.msra.mxu0 %v2654
        %2674 = vmatpush.bf16.msra.mxu0 %v2653
        %2675 = vmatpush.bf16.msra.mxu0 %v2652
        %2676 = vmatmul.bf16.gmra.mxu0 %v2594
        %v2677 = vpop.f32.mrf.mxu0
        %v2678 = vadd.f32 %v2619, %v2677
        %v2679 = vpop.f32.mrf.mxu0
        %v2680 = vadd.f32 %v2619, %v2679
        %2681 = vmatmul.bf16.gmra.mxu0 %v2595
        %v2682 = vpop.f32.mrf.mxu0
        %v2683 = vadd.f32 %v2619, %v2682
        %v2684 = vpop.f32.mrf.mxu0
        %v2685 = vadd.f32 %v2619, %v2684
        %2686 = vmatmul.bf16.gmra.mxu0 %v2596
        %v2687 = vpop.f32.mrf.mxu0
        %v2688 = vadd.f32 %v2619, %v2687
        %v2689 = vpop.f32.mrf.mxu0
        %v2690 = vadd.f32 %v2619, %v2689
        %2691 = vmatmul.bf16.gmra.mxu0 %v2597
        %v2692 = vpop.f32.mrf.mxu0
        %v2693 = vadd.f32 %v2619, %v2692
        %v2694 = vpop.f32.mrf.mxu0
        %v2695 = vadd.f32 %v2619, %v2694
        %2696 = vmatmul.bf16.gmra.mxu0 %v2598
        %v2697 = vpop.f32.mrf.mxu0
        %v2698 = vadd.f32 %v2619, %v2697
        %v2699 = vpop.f32.mrf.mxu0
        %v2700 = vadd.f32 %v2619, %v2699
        %2701 = vmatmul.bf16.gmra.mxu0 %v2599
        %v2702 = vpop.f32.mrf.mxu0
        %v2703 = vadd.f32 %v2619, %v2702
        %v2704 = vpop.f32.mrf.mxu0
        %v2705 = vadd.f32 %v2619, %v2704
        %2706 = vmatmul.bf16.gmra.mxu0 %v2600
        %v2707 = vpop.f32.mrf.mxu0
        %v2708 = vadd.f32 %v2619, %v2707
        %v2709 = vpop.f32.mrf.mxu0
        %v2710 = vadd.f32 %v2619, %v2709
        %2711 = vmatmul.bf16.gmra.mxu0 %v2601
        %v2712 = vpop.f32.mrf.mxu0
        %v2713 = vadd.f32 %v2619, %v2712
        %v2714 = vpop.f32.mrf.mxu0
        %v2715 = vadd.f32 %v2619, %v2714
        %2716 = vdwg.mxu0
        %2733 = vrot.lane.b32.xlu0 %v2678, 64
        %v2734 = vpop.permute.xlu0 %2733
        %2735 = vrot.lane.b32.xlu0 %v2680, 64
        %v2736 = vpop.permute.xlu0 %2735
        %2737 = vrot.lane.b32.xlu0 %v2683, 64
        %v2738 = vpop.permute.xlu0 %2737
        %2739 = vrot.lane.b32.xlu0 %v2685, 64
        %v2740 = vpop.permute.xlu0 %2739
        %2741 = vrot.lane.b32.xlu0 %v2688, 64
        %v2742 = vpop.permute.xlu0 %2741
        %2743 = vrot.lane.b32.xlu0 %v2690, 64
        %v2744 = vpop.permute.xlu0 %2743
        %2745 = vrot.lane.b32.xlu0 %v2693, 64
        %v2746 = vpop.permute.xlu0 %2745
        %2747 = vrot.lane.b32.xlu0 %v2695, 64
        %v2748 = vpop.permute.xlu0 %2747
        %2749 = vrot.lane.b32.xlu0 %v2698, 64
        %v2750 = vpop.permute.xlu0 %2749
        %2751 = vrot.lane.b32.xlu0 %v2700, 64
        %v2752 = vpop.permute.xlu0 %2751
        %2753 = vrot.lane.b32.xlu0 %v2703, 64
        %v2754 = vpop.permute.xlu0 %2753
        %2755 = vrot.lane.b32.xlu0 %v2705, 64
        %v2756 = vpop.permute.xlu0 %2755
        %2757 = vrot.lane.b32.xlu0 %v2708, 64
        %v2758 = vpop.permute.xlu0 %2757
        %2759 = vrot.lane.b32.xlu0 %v2710, 64
        %v2760 = vpop.permute.xlu0 %2759
        %2761 = vrot.lane.b32.xlu0 %v2713, 64
        %v2762 = vpop.permute.xlu0 %2761
        %2763 = vrot.lane.b32.xlu0 %v2715, 64
        %v2764 = vpop.permute.xlu0 %2763
        %vm2781 = vcmask 523264
        %v2782 = vsel %vm2781, %v2578, %v2734
        %v2783 = vsel %vm2781, %v2579, %v2736
        %v2784 = vsel %vm2781, %v2580, %v2738
        %v2785 = vsel %vm2781, %v2581, %v2740
        %v2786 = vsel %vm2781, %v2582, %v2742
        %v2787 = vsel %vm2781, %v2583, %v2744
        %v2788 = vsel %vm2781, %v2584, %v2746
        %v2789 = vsel %vm2781, %v2585, %v2748
        %v2790 = vsel %vm2781, %v2586, %v2750
        %v2791 = vsel %vm2781, %v2587, %v2752
        %v2792 = vsel %vm2781, %v2588, %v2754
        %v2793 = vsel %vm2781, %v2589, %v2756
        %v2794 = vsel %vm2781, %v2590, %v2758
        %v2795 = vsel %vm2781, %v2591, %v2760
        %v2796 = vsel %vm2781, %v2592, %v2762
        %v2797 = vsel %vm2781, %v2593, %v2764
        %2798 = vst [vmem:[%s459] sm:$0xff] %v2782
        %2799 = vst [vmem:[%s459 + $0x8] sm:$0xff] %v2783
        %2800 = vst [vmem:[%s459 + $0x10] sm:$0xff] %v2784
        %2801 = vst [vmem:[%s459 + $0x18] sm:$0xff] %v2785
        %2802 = vst [vmem:[%s459 + $0x20] sm:$0xff] %v2786
        %2803 = vst [vmem:[%s459 + $0x28] sm:$0xff] %v2787
        %2804 = vst [vmem:[%s459 + $0x30] sm:$0xff] %v2788
        %2805 = vst [vmem:[%s459 + $0x38] sm:$0xff] %v2789
        %2806 = vst [vmem:[%s459 + $0x40] sm:$0xff] %v2790
        %2807 = vst [vmem:[%s459 + $0x48] sm:$0xff] %v2791
        %2808 = vst [vmem:[%s459 + $0x50] sm:$0xff] %v2792
        %2809 = vst [vmem:[%s459 + $0x58] sm:$0xff] %v2793
        %2810 = vst [vmem:[%s459 + $0x60] sm:$0xff] %v2794
        %2811 = vst [vmem:[%s459 + $0x68] sm:$0xff] %v2795
        %2812 = vst [vmem:[%s459 + $0x70] sm:$0xff] %v2796
        %2813 = vst [vmem:[%s459 + $0x78] sm:$0xff] %v2797
        %s2814 = sand.u32 %s287, 1
        %s2815 = scalar_lea.sflag [#allocation3], %s2814
        %s2816 = sand.u32 %s287, 1
        %s2817 = smul.addr %s2816, 128
        %s2818 = scalar_lea.vmem [#allocation2], %s2817
        // Predicated region
        $region61: #{tpu_custom_call.1} parent=59 // pred_check
          %p2819 = pneg %p297
        $region62: #{tpu_custom_call.1} parent=59 // pred_check_branch
          %2821 = sbr.rel (%p2819) target = $region64
        $region63: #{tpu_custom_call.1} parent=59 // pred_region
          %s2822 = smul.u32 16, %s29
          %2824 = vsyncadd %s2815, 0
          %s2825 = smul.addr %s28, 16
          %s2826 = sadd.s32 %s2822, %s2825
          %s2827 = smul.addr %s2826, 8
          %s2828 = scalar_lea.hbm %s10, %s2827
          %s2829 = sshll.u32 %s2818, 4
          %s2830 = int_to_ptr.vmem [resolvable:$true] %s2829
          %s2831 = sshll.u32 %s2828, 4
          %s2832 = int_to_ptr.hbm [resolvable:$true] %s2831
          %2837 = dma.vmem_to_hbm [thread:$0]  %s2830, 2048, %s2832, %s2815, 128, 128, 8
        $region64: #{tpu_custom_call.1} parent=59 // pred_fallthru
          _
      $region60: #{tpu_custom_call.1} parent=5 // pred_fallthru
        _
      %p2838 = scmp.le.s32.totalorder 2, %s19
      // Predicated region
      $region65: #{tpu_custom_call.1} parent=5 // pred_check
        %p2839 = pneg %p2838
      $region66: #{tpu_custom_call.1} parent=5 // pred_check_branch
        %2841 = sbr.rel (%p2839) target = $region68
      $region67: #{tpu_custom_call.1} parent=5 // pred_region
        %s2842 = ssub.s32 %s19, 2
        // Predicated region
        $region69: #{tpu_custom_call.1} parent=67 // pred_check
          %p2843 = pneg %p303
        $region70: #{tpu_custom_call.1} parent=67 // pred_check_branch
          %2845 = sbr.rel (%p2843) target = $region72
        $region71: #{tpu_custom_call.1} parent=67 // pred_region
          %s2846 = sand.u32 %s288, 1
          %s2847 = scalar_lea.sflag [#allocation3], %s2846
          %s2848 = sand.u32 %s288, 1
          %s2849 = smul.addr %s2848, 128
          %s2850 = scalar_lea.vmem [#allocation2], %s2849
          %2852 = dma.done %s2847, 2048
        $region72: #{tpu_custom_call.1} parent=67 // pred_fallthru
          _
      $region68: #{tpu_custom_call.1} parent=5 // pred_fallthru
        _
    $region6: #{tpu_custom_call.1} parent=1 // loop_footer
      %s23 = sadd.s32 1, %s19
    $region7: #{tpu_custom_call.1} parent=1 // loop_footer_branch
      %18 = sbr.rel target = $region3
    $region8: #{tpu_custom_call.1} parent=1 // loop_exit
      _
    %2853 = vsyncpa [#allocation3], 1
    %s2854 = scalar_lea.sflag [#allocation3], 1
    %2855 = vsyncpa %s2854, 1

</llo_original>
